<compile_context>
chip_gen: v7x
topology: tpu7x:2x2x1
jax: 0.10.0
libtpu: 0.0.40
codegen_flags: <defaults>
</compile_context>

<pallas_src>
import jax
import jax.numpy as jnp
from jax import lax
from jax.experimental import pallas as pl
from jax.experimental.pallas import tpu as pltpu

LEAKY_SLOPE = 0.01
HP = 128              # padded hidden width (lane-dense)
CP = 128              # padded packed-input feature width
MIN_SENTINEL = 3e38   # running-min init; "> 1e38" afterwards means "no incoming edge"


def _rup8(n):
    return ((n + 7) // 8) * 8


def _leaky(y):
    return jnp.where(y > 0, y, LEAKY_SLOPE * y)


def _edge_loop(e_cnt, body):
    """Serial loop over edges (loop-carried dep through the running-min ref)."""
    if e_cnt <= 64:
        # Full trace-time unroll: SMEM index reads become static, scheduler sees all.
        for i in range(e_cnt):
            body(i)
    else:
        uf = max(u for u in (8, 4, 2, 1) if e_cnt % u == 0)
        lax.fori_loop(0, e_cnt, lambda i, c: (body(i), c)[1], 0, unroll=uf)


# ----------------------------------------------------------------------------
# Fused forward: one pallas_call for the whole encoder
# ----------------------------------------------------------------------------
@jax.jit
def brep_face_encoder(params, vertices, edges, loops, faces,
                      vertex_to_edge, edge_to_loop, loop_to_face):
    h = params["v_in"][0].shape[1]
    nv, cv = vertices.shape
    ne, ce = edges.shape
    nl, cl = loops.shape
    nf, cf = faces.shape
    assert h <= HP and cv + ce + cl + cf + 4 <= CP

    # 8-row aligned section offsets inside the packed feature buffer
    off_v = 0
    off_e = _rup8(nv)
    off_l = off_e + _rup8(ne)
    off_f = off_l + _rup8(nl)
    n_rows = off_f + _rup8(nf)
    nfp = _rup8(nf)

    col_v, col_e, col_l, col_f = 0, cv, cv + ce, cv + ce + cl
    bias_col = cv + ce + cl + cf                  # 4 per-type bias indicator columns

    # ---- pack block-diagonal input + bias indicators (one-time glue before kernel) ----
    x = jnp.zeros((n_rows, CP), jnp.float32)
    x = x.at[off_v:off_v + nv, col_v:col_v + cv].set(vertices)
    x = x.at[off_e:off_e + ne, col_e:col_e + ce].set(edges)
    x = x.at[off_l:off_l + nl, col_l:col_l + cl].set(loops)
    x = x.at[off_f:off_f + nf, col_f:col_f + cf].set(faces)
    x = x.at[off_v:off_v + nv, bias_col + 0].set(1.0)
    x = x.at[off_e:off_e + ne, bias_col + 1].set(1.0)
    x = x.at[off_l:off_l + nl, bias_col + 2].set(1.0)
    x = x.at[off_f:off_f + nf, bias_col + 3].set(1.0)

    # ---- pack the four input LinearBlocks into one (CP, HP) weight ----
    w_in = jnp.zeros((CP, HP), jnp.float32)
    for (w, b), c0, cw, brow in (
            (params["v_in"], col_v, cv, bias_col + 0),
            (params["e_in"], col_e, ce, bias_col + 1),
            (params["l_in"], col_l, cl, bias_col + 2),
            (params["f_in"], col_f, cf, bias_col + 3)):
        w_in = w_in.at[c0:c0 + cw, :h].set(w)
        w_in = w_in.at[brow, :h].set(b[0])

    # ---- stack + pre-split the three conv MLPs (w_dst / w_max halves, zero padded) ----
    wd = jnp.zeros((3, HP, HP), jnp.float32)
    wm = jnp.zeros((3, HP, HP), jnp.float32)
    bb = jnp.zeros((3, 1, HP), jnp.float32)
    for c, (w, b) in enumerate((params["v_to_e"], params["e_to_l"], params["l_to_f"])):
        wd = wd.at[c, :h, :h].set(w[:h])
        wm = wm.at[c, :h, :h].set(w[h:])
        bb = bb.at[c, 0, :h].set(b[0])

    # ---- flatten edge indices for scalar prefetch into SMEM ----
    conv_meta = []
    idx_parts = []
    cursor = 0
    for e_arr, off_s, off_d, ndp in (
            (vertex_to_edge, off_v, off_e, _rup8(ne)),
            (edge_to_loop, off_e, off_l, _rup8(nl)),
            (loop_to_face, off_l, off_f, _rup8(nf))):
        e_cnt = e_arr.shape[1]
        idx_parts.append(e_arr[0].astype(jnp.int32))
        idx_parts.append(e_arr[1].astype(jnp.int32))
        conv_meta.append(dict(soff=cursor, doff=cursor + e_cnt, e_cnt=e_cnt,
                              off_s=off_s, off_d=off_d, ndp=ndp))
        cursor += 2 * e_cnt
    idx_flat = jnp.concatenate(idx_parts)
    maxd = max(m["ndp"] for m in conv_meta)

    def kernel(idx_ref, x_ref, w_in_ref, wd_ref, wm_ref, b_ref, o_ref,
               feat_ref, mn_ref):
        # All four input LinearBlocks in a single MXU pass (bias via indicator cols).
        y0 = jnp.dot(x_ref[...], w_in_ref[...], preferred_element_type=jnp.float32)
        feat_ref[...] = _leaky(y0)

        for c, m in enumerate(conv_meta):
            soff, doff, e_cnt = m["soff"], m["doff"], m["e_cnt"]
            off_s, off_d, ndp = m["off_s"], m["off_d"], m["ndp"]

            # Running per-destination MIN of gathered source rows.
            #   scatter_max_d(x_dst[d] - x_src[s]) == x_dst[d] - scatter_min_d(x_src[s])
            mn_ref[pl.ds(0, ndp), :] = jnp.full((ndp, HP), MIN_SENTINEL, jnp.float32)

            def body(i):
                s = idx_ref[soff + i]
                d = idx_ref[doff + i]
                xs = feat_ref[pl.ds(off_s + s, 1), :]
                cur = mn_ref[pl.ds(d, 1), :]
                mn_ref[pl.ds(d, 1), :] = jnp.minimum(cur, xs)

            _edge_loop(e_cnt, body)

            # Residual MLP: x_dst + leaky(x_dst @ W_dst + maxes @ W_max + b)
            xd_blk = feat_ref[pl.ds(off_d, ndp), :]
            mn_blk = mn_ref[pl.ds(0, ndp), :]
            mx_blk = jnp.where(mn_blk < 1e38, xd_blk - mn_blk, 0.0)
            y = (jnp.dot(xd_blk, wd_ref[c], preferred_element_type=jnp.float32)
                 + jnp.dot(mx_blk, wm_ref[c], preferred_element_type=jnp.float32)
                 + b_ref[c])
            feat_ref[pl.ds(off_d, ndp), :] = xd_blk + _leaky(y)

        o_ref[...] = feat_ref[pl.ds(off_f, nfp), :]

    out_padded = pl.pallas_call(
        kernel,
        out_shape=jax.ShapeDtypeStruct((nfp, HP), jnp.float32),
        grid_spec=pltpu.PrefetchScalarGridSpec(
            num_scalar_prefetch=1,
            grid=(1,),
            in_specs=[
                pl.BlockSpec((n_rows, CP), lambda i, idx: (0, 0)),
                pl.BlockSpec((CP, HP), lambda i, idx: (0, 0)),
                pl.BlockSpec((3, HP, HP), lambda i, idx: (0, 0, 0)),
                pl.BlockSpec((3, HP, HP), lambda i, idx: (0, 0, 0)),
                pl.BlockSpec((3, 1, HP), lambda i, idx: (0, 0, 0)),
            ],
            out_specs=pl.BlockSpec((nfp, HP), lambda i, idx: (0, 0)),
            scratch_shapes=[
                pltpu.VMEM((n_rows, HP), jnp.float32),   # all entity features (resident)
                pltpu.VMEM((maxd, HP), jnp.float32),     # per-destination running min
            ],
        ),
        compiler_params=pltpu.CompilerParams(
            dimension_semantics=("arbitrary",),
            vmem_limit_bytes=32 * 1024 * 1024,
        ),
    )(idx_flat, x, w_in, wd, wm, bb)

    return out_padded[:nf, :h]


# ----------------------------------------------------------------------------
# Parameter init (deterministic, synthetic) — weights stored pre-transposed as
# (c_in, c_out); bias as (1, c_out).
# ----------------------------------------------------------------------------
def _init_linear(key, c_in, c_out):
    kw, kb = jax.random.split(key)
    scale = 1.0 / jnp.sqrt(jnp.float32(c_in))
    w = jax.random.uniform(kw, (c_in, c_out), jnp.float32, -scale, scale)
    b = jax.random.uniform(kb, (1, c_out), jnp.float32, -scale, scale)
    return w, b


def init_params(key, hidden):
    ks = jax.random.split(key, 7)
    return {
        "v_in": _init_linear(ks[0], 3, hidden),
        "e_in": _init_linear(ks[1], 18, hidden),
        "l_in": _init_linear(ks[2], 10, hidden),
        "f_in": _init_linear(ks[3], 21, hidden),
        "v_to_e": _init_linear(ks[4], 2 * hidden, hidden),
        "e_to_l": _init_linear(ks[5], 2 * hidden, hidden),
        "l_to_f": _init_linear(ks[6], 2 * hidden, hidden),
    }


# ----------------------------------------------------------------------------
# Pure-JAX reference (for correctness check of the fused kernel)
# ----------------------------------------------------------------------------
def _ref_forward(params, vertices, edges, loops, faces, v2e, e2l, l2f):
    hi = jax.lax.Precision.HIGHEST

    def lin(x, w, b):
        return _leaky(jnp.dot(x, w, precision=hi) + b)

    def conv(xs, xd, e, w, b):
        nd, hh = xd.shape
        diffs = xd[e[1]] - xs[e[0]]
        mx = jnp.full((nd, hh), -jnp.inf, jnp.float32).at[e[1]].max(diffs)
        has = jnp.zeros((nd,), bool).at[e[1]].set(True)
        mx = jnp.where(has[:, None], mx, 0.0)         # empty destinations -> 0
        return xd + lin(jnp.concatenate([xd, mx], axis=1), w, b)

    v = lin(vertices, *params["v_in"])
    e = lin(edges, *params["e_in"])
    l = lin(loops, *params["l_in"])
    f = lin(faces, *params["f_in"])
    e = conv(v, e, v2e, *params["v_to_e"])
    l = conv(e, l, e2l, *params["e_to_l"])
    f = conv(l, f, l2f, *params["l_to_f"])
    return f


if __name__ == "__main__":
    key = jax.random.PRNGKey(0)
    ks = jax.random.split(key, 10)

    HIDDEN = 32
    NV, NE, NL, NF = 12, 10, 8, 6           # vertices / edges / loops / faces
    E_VE, E_EL, E_LF = 20, 16, 12           # bipartite edge counts

    vertices = jax.random.normal(ks[0], (NV, 3), jnp.float32)
    edges = jax.random.normal(ks[1], (NE, 18), jnp.float32)
    loops = jax.random.normal(ks[2], (NL, 10), jnp.float32)
    faces = jax.random.normal(ks[3], (NF, 21), jnp.float32)

    # (2, E) index arrays: row 0 = source idx, row 1 = destination idx.
    vertex_to_edge = jnp.stack([
        jax.random.randint(ks[4], (E_VE,), 0, NV, dtype=jnp.int32),
        (jnp.arange(E_VE, dtype=jnp.int32) % NE)])
    edge_to_loop = jnp.stack([
        jax.random.randint(ks[5], (E_EL,), 0, NE, dtype=jnp.int32),
        (jnp.arange(E_EL, dtype=jnp.int32) % NL)])
    # Last face (index NF-1) deliberately receives no incoming edge to exercise the
    # "empty destination -> 0" scatter-max path.
    loop_to_face = jnp.stack([
        jax.random.randint(ks[6], (E_LF,), 0, NL, dtype=jnp.int32),
        (jnp.arange(E_LF, dtype=jnp.int32) % (NF - 1))])

    params = init_params(ks[7], HIDDEN)

    out = brep_face_encoder(params, vertices, edges, loops, faces,
                            vertex_to_edge, edge_to_loop, loop_to_face)
    jax.block_until_ready(out)
    assert out.shape == (NF, HIDDEN) and out.dtype == jnp.float32

    ref = _ref_forward(params, vertices, edges, loops, faces,
                       vertex_to_edge, edge_to_loop, loop_to_face)
    assert jnp.allclose(out, ref, rtol=2e-3, atol=2e-3), (
        "max abs err=%e" % float(jnp.max(jnp.abs(out - ref))))
    print("KERNEL_OK")
</pallas_src>

<mosaic_0001>
module attributes {stable_mosaic.version = 11 : i64} {
  func.func @kernel(%arg0: i32, %arg1: memref<96xi32, #tpu.memory_space<smem>>, %arg2: memref<48x128xf32, #tpu.memory_space<vmem>>, %arg3: memref<128x128xf32, #tpu.memory_space<vmem>>, %arg4: memref<3x128x128xf32, #tpu.memory_space<vmem>>, %arg5: memref<3x128x128xf32, #tpu.memory_space<vmem>>, %arg6: memref<3x1x128xf32, #tpu.memory_space<vmem>>, %arg7: memref<8x128xf32, #tpu.memory_space<vmem>>, %arg8: memref<48x128xf32, #tpu.memory_space<vmem>>, %arg9: memref<16x128xf32, #tpu.memory_space<vmem>>) attributes {dimension_semantics = [#tpu.dimension_semantics<arbitrary>], iteration_bounds = array<i64: 1>, scalar_prefetch = 1 : i64, scratch_operands = 2 : i64, tpu.core_type = #tpu.core_type<tc>, window_params = [{pipeline_mode = #tpu.pipeline_mode<synchronous>, transform_indices = @transform_0, window_bounds = array<i64: 48, 128>}, {pipeline_mode = #tpu.pipeline_mode<synchronous>, transform_indices = @transform_1, window_bounds = array<i64: 128, 128>}, {pipeline_mode = #tpu.pipeline_mode<synchronous>, transform_indices = @transform_2, window_bounds = array<i64: 3, 128, 128>}, {pipeline_mode = #tpu.pipeline_mode<synchronous>, transform_indices = @transform_3, window_bounds = array<i64: 3, 128, 128>}, {pipeline_mode = #tpu.pipeline_mode<synchronous>, transform_indices = @transform_4, window_bounds = array<i64: 3, 1, 128>}, {pipeline_mode = #tpu.pipeline_mode<synchronous>, transform_indices = @transform_5, window_bounds = array<i64: 8, 128>}]} {
    %c0 = arith.constant 0 : index
    %c0_0 = arith.constant 0 : index
    %0 = vector.load %arg2[%c0, %c0_0] : memref<48x128xf32, #tpu.memory_space<vmem>>, vector<48x128xf32>
    %c0_1 = arith.constant 0 : index
    %c0_2 = arith.constant 0 : index
    %1 = vector.load %arg3[%c0_1, %c0_2] : memref<128x128xf32, #tpu.memory_space<vmem>>, vector<128x128xf32>
    %cst = arith.constant dense<0.000000e+00> : vector<48x128xf32>
    %2 = tpu.matmul %0, %1, %cst {dimension_numbers = #tpu.dot_dimension_numbers<[1], [0], [0], [1], [0, 0, 1, 1], [], []>} : vector<48x128xf32>, vector<128x128xf32>, vector<48x128xf32> -> vector<48x128xf32>
    %cst_3 = arith.constant 0.000000e+00 : f32
    %3 = vector.broadcast %cst_3 : f32 to vector<48x128xf32>
    %4 = arith.cmpf ogt, %2, %3 : vector<48x128xf32>
    %cst_4 = arith.constant 0.00999999977 : f32
    %5 = vector.broadcast %cst_4 : f32 to vector<48x128xf32>
    %6 = arith.mulf %5, %2 : vector<48x128xf32>
    %7 = arith.select %4, %2, %6 : vector<48x128xi1>, vector<48x128xf32>
    %c0_5 = arith.constant 0 : index
    %c0_6 = arith.constant 0 : index
    %8 = vector.load %arg8[%c0_5, %c0_6] : memref<48x128xf32, #tpu.memory_space<vmem>>, vector<48x128xf32>
    tpu.vector_store %arg8[%c0_5, %c0_6], %7 {strides = array<i32>} : memref<48x128xf32, #tpu.memory_space<vmem>>, vector<48x128xf32>,
    %cst_7 = arith.constant 3.000000e+38 : f32
    %9 = vector.broadcast %cst_7 : f32 to vector<16x128xf32>
    %c0_8 = arith.constant 0 : index
    %c0_9 = arith.constant 0 : index
    %10 = vector.load %arg9[%c0_8, %c0_9] : memref<16x128xf32, #tpu.memory_space<vmem>>, vector<16x128xf32>
    tpu.vector_store %arg9[%c0_8, %c0_9], %9 {strides = array<i32>} : memref<16x128xf32, #tpu.memory_space<vmem>>, vector<16x128xf32>,
    %c0_10 = arith.constant 0 : index
    %11 = memref.load %arg1[%c0_10] : memref<96xi32, #tpu.memory_space<smem>>
    %c20 = arith.constant 20 : index
    %12 = memref.load %arg1[%c20] : memref<96xi32, #tpu.memory_space<smem>>
    %c0_i32 = arith.constant 0 : i32
    %13 = arith.addi %c0_i32, %11 : i32
    %14 = arith.index_cast %13 : i32 to index
    %c0_11 = arith.constant 0 : index
    %15 = vector.load %arg8[%14, %c0_11] : memref<48x128xf32, #tpu.memory_space<vmem>>, vector<1x128xf32>
    %16 = arith.index_cast %12 : i32 to index
    %c0_12 = arith.constant 0 : index
    %17 = vector.load %arg9[%16, %c0_12] : memref<16x128xf32, #tpu.memory_space<vmem>>, vector<1x128xf32>
    %18 = arith.minimumf %17, %15 : vector<1x128xf32>
    %19 = arith.index_cast %12 : i32 to index
    %c0_13 = arith.constant 0 : index
    %20 = vector.load %arg9[%19, %c0_13] : memref<16x128xf32, #tpu.memory_space<vmem>>, vector<1x128xf32>
    tpu.vector_store %arg9[%19, %c0_13], %18 {strides = array<i32>} : memref<16x128xf32, #tpu.memory_space<vmem>>, vector<1x128xf32>,
    %c1 = arith.constant 1 : index
    %21 = memref.load %arg1[%c1] : memref<96xi32, #tpu.memory_space<smem>>
    %c21 = arith.constant 21 : index
    %22 = memref.load %arg1[%c21] : memref<96xi32, #tpu.memory_space<smem>>
    %c0_i32_14 = arith.constant 0 : i32
    %23 = arith.addi %c0_i32_14, %21 : i32
    %24 = arith.index_cast %23 : i32 to index
    %c0_15 = arith.constant 0 : index
    %25 = vector.load %arg8[%24, %c0_15] : memref<48x128xf32, #tpu.memory_space<vmem>>, vector<1x128xf32>
    %26 = arith.index_cast %22 : i32 to index
    %c0_16 = arith.constant 0 : index
    %27 = vector.load %arg9[%26, %c0_16] : memref<16x128xf32, #tpu.memory_space<vmem>>, vector<1x128xf32>
    %28 = arith.minimumf %27, %25 : vector<1x128xf32>
    %29 = arith.index_cast %22 : i32 to index
    %c0_17 = arith.constant 0 : index
    %30 = vector.load %arg9[%29, %c0_17] : memref<16x128xf32, #tpu.memory_space<vmem>>, vector<1x128xf32>
    tpu.vector_store %arg9[%29, %c0_17], %28 {strides = array<i32>} : memref<16x128xf32, #tpu.memory_space<vmem>>, vector<1x128xf32>,
    %c2 = arith.constant 2 : index
    %31 = memref.load %arg1[%c2] : memref<96xi32, #tpu.memory_space<smem>>
    %c22 = arith.constant 22 : index
    %32 = memref.load %arg1[%c22] : memref<96xi32, #tpu.memory_space<smem>>
    %c0_i32_18 = arith.constant 0 : i32
    %33 = arith.addi %c0_i32_18, %31 : i32
    %34 = arith.index_cast %33 : i32 to index
    %c0_19 = arith.constant 0 : index
    %35 = vector.load %arg8[%34, %c0_19] : memref<48x128xf32, #tpu.memory_space<vmem>>, vector<1x128xf32>
    %36 = arith.index_cast %32 : i32 to index
    %c0_20 = arith.constant 0 : index
    %37 = vector.load %arg9[%36, %c0_20] : memref<16x128xf32, #tpu.memory_space<vmem>>, vector<1x128xf32>
    %38 = arith.minimumf %37, %35 : vector<1x128xf32>
    %39 = arith.index_cast %32 : i32 to index
    %c0_21 = arith.constant 0 : index
    %40 = vector.load %arg9[%39, %c0_21] : memref<16x128xf32, #tpu.memory_space<vmem>>, vector<1x128xf32>
    tpu.vector_store %arg9[%39, %c0_21], %38 {strides = array<i32>} : memref<16x128xf32, #tpu.memory_space<vmem>>, vector<1x128xf32>,
    %c3 = arith.constant 3 : index
    %41 = memref.load %arg1[%c3] : memref<96xi32, #tpu.memory_space<smem>>
    %c23 = arith.constant 23 : index
    %42 = memref.load %arg1[%c23] : memref<96xi32, #tpu.memory_space<smem>>
    %c0_i32_22 = arith.constant 0 : i32
    %43 = arith.addi %c0_i32_22, %41 : i32
    %44 = arith.index_cast %43 : i32 to index
    %c0_23 = arith.constant 0 : index
    %45 = vector.load %arg8[%44, %c0_23] : memref<48x128xf32, #tpu.memory_space<vmem>>, vector<1x128xf32>
    %46 = arith.index_cast %42 : i32 to index
    %c0_24 = arith.constant 0 : index
    %47 = vector.load %arg9[%46, %c0_24] : memref<16x128xf32, #tpu.memory_space<vmem>>, vector<1x128xf32>
    %48 = arith.minimumf %47, %45 : vector<1x128xf32>
    %49 = arith.index_cast %42 : i32 to index
    %c0_25 = arith.constant 0 : index
    %50 = vector.load %arg9[%49, %c0_25] : memref<16x128xf32, #tpu.memory_space<vmem>>, vector<1x128xf32>
    tpu.vector_store %arg9[%49, %c0_25], %48 {strides = array<i32>} : memref<16x128xf32, #tpu.memory_space<vmem>>, vector<1x128xf32>,
    %c4 = arith.constant 4 : index
    %51 = memref.load %arg1[%c4] : memref<96xi32, #tpu.memory_space<smem>>
    %c24 = arith.constant 24 : index
    %52 = memref.load %arg1[%c24] : memref<96xi32, #tpu.memory_space<smem>>
    %c0_i32_26 = arith.constant 0 : i32
    %53 = arith.addi %c0_i32_26, %51 : i32
    %54 = arith.index_cast %53 : i32 to index
    %c0_27 = arith.constant 0 : index
    %55 = vector.load %arg8[%54, %c0_27] : memref<48x128xf32, #tpu.memory_space<vmem>>, vector<1x128xf32>
    %56 = arith.index_cast %52 : i32 to index
    %c0_28 = arith.constant 0 : index
    %57 = vector.load %arg9[%56, %c0_28] : memref<16x128xf32, #tpu.memory_space<vmem>>, vector<1x128xf32>
    %58 = arith.minimumf %57, %55 : vector<1x128xf32>
    %59 = arith.index_cast %52 : i32 to index
    %c0_29 = arith.constant 0 : index
    %60 = vector.load %arg9[%59, %c0_29] : memref<16x128xf32, #tpu.memory_space<vmem>>, vector<1x128xf32>
    tpu.vector_store %arg9[%59, %c0_29], %58 {strides = array<i32>} : memref<16x128xf32, #tpu.memory_space<vmem>>, vector<1x128xf32>,
    %c5 = arith.constant 5 : index
    %61 = memref.load %arg1[%c5] : memref<96xi32, #tpu.memory_space<smem>>
    %c25 = arith.constant 25 : index
    %62 = memref.load %arg1[%c25] : memref<96xi32, #tpu.memory_space<smem>>
    %c0_i32_30 = arith.constant 0 : i32
    %63 = arith.addi %c0_i32_30, %61 : i32
    %64 = arith.index_cast %63 : i32 to index
    %c0_31 = arith.constant 0 : index
    %65 = vector.load %arg8[%64, %c0_31] : memref<48x128xf32, #tpu.memory_space<vmem>>, vector<1x128xf32>
    %66 = arith.index_cast %62 : i32 to index
    %c0_32 = arith.constant 0 : index
    %67 = vector.load %arg9[%66, %c0_32] : memref<16x128xf32, #tpu.memory_space<vmem>>, vector<1x128xf32>
    %68 = arith.minimumf %67, %65 : vector<1x128xf32>
    %69 = arith.index_cast %62 : i32 to index
    %c0_33 = arith.constant 0 : index
    %70 = vector.load %arg9[%69, %c0_33] : memref<16x128xf32, #tpu.memory_space<vmem>>, vector<1x128xf32>
    tpu.vector_store %arg9[%69, %c0_33], %68 {strides = array<i32>} : memref<16x128xf32, #tpu.memory_space<vmem>>, vector<1x128xf32>,
    %c6 = arith.constant 6 : index
    %71 = memref.load %arg1[%c6] : memref<96xi32, #tpu.memory_space<smem>>
    %c26 = arith.constant 26 : index
    %72 = memref.load %arg1[%c26] : memref<96xi32, #tpu.memory_space<smem>>
    %c0_i32_34 = arith.constant 0 : i32
    %73 = arith.addi %c0_i32_34, %71 : i32
    %74 = arith.index_cast %73 : i32 to index
    %c0_35 = arith.constant 0 : index
    %75 = vector.load %arg8[%74, %c0_35] : memref<48x128xf32, #tpu.memory_space<vmem>>, vector<1x128xf32>
    %76 = arith.index_cast %72 : i32 to index
    %c0_36 = arith.constant 0 : index
    %77 = vector.load %arg9[%76, %c0_36] : memref<16x128xf32, #tpu.memory_space<vmem>>, vector<1x128xf32>
    %78 = arith.minimumf %77, %75 : vector<1x128xf32>
    %79 = arith.index_cast %72 : i32 to index
    %c0_37 = arith.constant 0 : index
    %80 = vector.load %arg9[%79, %c0_37] : memref<16x128xf32, #tpu.memory_space<vmem>>, vector<1x128xf32>
    tpu.vector_store %arg9[%79, %c0_37], %78 {strides = array<i32>} : memref<16x128xf32, #tpu.memory_space<vmem>>, vector<1x128xf32>,
    %c7 = arith.constant 7 : index
    %81 = memref.load %arg1[%c7] : memref<96xi32, #tpu.memory_space<smem>>
    %c27 = arith.constant 27 : index
    %82 = memref.load %arg1[%c27] : memref<96xi32, #tpu.memory_space<smem>>
    %c0_i32_38 = arith.constant 0 : i32
    %83 = arith.addi %c0_i32_38, %81 : i32
    %84 = arith.index_cast %83 : i32 to index
    %c0_39 = arith.constant 0 : index
    %85 = vector.load %arg8[%84, %c0_39] : memref<48x128xf32, #tpu.memory_space<vmem>>, vector<1x128xf32>
    %86 = arith.index_cast %82 : i32 to index
    %c0_40 = arith.constant 0 : index
    %87 = vector.load %arg9[%86, %c0_40] : memref<16x128xf32, #tpu.memory_space<vmem>>, vector<1x128xf32>
    %88 = arith.minimumf %87, %85 : vector<1x128xf32>
    %89 = arith.index_cast %82 : i32 to index
    %c0_41 = arith.constant 0 : index
    %90 = vector.load %arg9[%89, %c0_41] : memref<16x128xf32, #tpu.memory_space<vmem>>, vector<1x128xf32>
    tpu.vector_store %arg9[%89, %c0_41], %88 {strides = array<i32>} : memref<16x128xf32, #tpu.memory_space<vmem>>, vector<1x128xf32>,
    %c8 = arith.constant 8 : index
    %91 = memref.load %arg1[%c8] : memref<96xi32, #tpu.memory_space<smem>>
    %c28 = arith.constant 28 : index
    %92 = memref.load %arg1[%c28] : memref<96xi32, #tpu.memory_space<smem>>
    %c0_i32_42 = arith.constant 0 : i32
    %93 = arith.addi %c0_i32_42, %91 : i32
    %94 = arith.index_cast %93 : i32 to index
    %c0_43 = arith.constant 0 : index
    %95 = vector.load %arg8[%94, %c0_43] : memref<48x128xf32, #tpu.memory_space<vmem>>, vector<1x128xf32>
    %96 = arith.index_cast %92 : i32 to index
    %c0_44 = arith.constant 0 : index
    %97 = vector.load %arg9[%96, %c0_44] : memref<16x128xf32, #tpu.memory_space<vmem>>, vector<1x128xf32>
    %98 = arith.minimumf %97, %95 : vector<1x128xf32>
    %99 = arith.index_cast %92 : i32 to index
    %c0_45 = arith.constant 0 : index
    %100 = vector.load %arg9[%99, %c0_45] : memref<16x128xf32, #tpu.memory_space<vmem>>, vector<1x128xf32>
    tpu.vector_store %arg9[%99, %c0_45], %98 {strides = array<i32>} : memref<16x128xf32, #tpu.memory_space<vmem>>, vector<1x128xf32>,
    %c9 = arith.constant 9 : index
    %101 = memref.load %arg1[%c9] : memref<96xi32, #tpu.memory_space<smem>>
    %c29 = arith.constant 29 : index
    %102 = memref.load %arg1[%c29] : memref<96xi32, #tpu.memory_space<smem>>
    %c0_i32_46 = arith.constant 0 : i32
    %103 = arith.addi %c0_i32_46, %101 : i32
    %104 = arith.index_cast %103 : i32 to index
    %c0_47 = arith.constant 0 : index
    %105 = vector.load %arg8[%104, %c0_47] : memref<48x128xf32, #tpu.memory_space<vmem>>, vector<1x128xf32>
    %106 = arith.index_cast %102 : i32 to index
    %c0_48 = arith.constant 0 : index
    %107 = vector.load %arg9[%106, %c0_48] : memref<16x128xf32, #tpu.memory_space<vmem>>, vector<1x128xf32>
    %108 = arith.minimumf %107, %105 : vector<1x128xf32>
    %109 = arith.index_cast %102 : i32 to index
    %c0_49 = arith.constant 0 : index
    %110 = vector.load %arg9[%109, %c0_49] : memref<16x128xf32, #tpu.memory_space<vmem>>, vector<1x128xf32>
    tpu.vector_store %arg9[%109, %c0_49], %108 {strides = array<i32>} : memref<16x128xf32, #tpu.memory_space<vmem>>, vector<1x128xf32>,
    %c10 = arith.constant 10 : index
    %111 = memref.load %arg1[%c10] : memref<96xi32, #tpu.memory_space<smem>>
    %c30 = arith.constant 30 : index
    %112 = memref.load %arg1[%c30] : memref<96xi32, #tpu.memory_space<smem>>
    %c0_i32_50 = arith.constant 0 : i32
    %113 = arith.addi %c0_i32_50, %111 : i32
    %114 = arith.index_cast %113 : i32 to index
    %c0_51 = arith.constant 0 : index
    %115 = vector.load %arg8[%114, %c0_51] : memref<48x128xf32, #tpu.memory_space<vmem>>, vector<1x128xf32>
    %116 = arith.index_cast %112 : i32 to index
    %c0_52 = arith.constant 0 : index
    %117 = vector.load %arg9[%116, %c0_52] : memref<16x128xf32, #tpu.memory_space<vmem>>, vector<1x128xf32>
    %118 = arith.minimumf %117, %115 : vector<1x128xf32>
    %119 = arith.index_cast %112 : i32 to index
    %c0_53 = arith.constant 0 : index
    %120 = vector.load %arg9[%119, %c0_53] : memref<16x128xf32, #tpu.memory_space<vmem>>, vector<1x128xf32>
    tpu.vector_store %arg9[%119, %c0_53], %118 {strides = array<i32>} : memref<16x128xf32, #tpu.memory_space<vmem>>, vector<1x128xf32>,
    %c11 = arith.constant 11 : index
    %121 = memref.load %arg1[%c11] : memref<96xi32, #tpu.memory_space<smem>>
    %c31 = arith.constant 31 : index
    %122 = memref.load %arg1[%c31] : memref<96xi32, #tpu.memory_space<smem>>
    %c0_i32_54 = arith.constant 0 : i32
    %123 = arith.addi %c0_i32_54, %121 : i32
    %124 = arith.index_cast %123 : i32 to index
    %c0_55 = arith.constant 0 : index
    %125 = vector.load %arg8[%124, %c0_55] : memref<48x128xf32, #tpu.memory_space<vmem>>, vector<1x128xf32>
    %126 = arith.index_cast %122 : i32 to index
    %c0_56 = arith.constant 0 : index
    %127 = vector.load %arg9[%126, %c0_56] : memref<16x128xf32, #tpu.memory_space<vmem>>, vector<1x128xf32>
    %128 = arith.minimumf %127, %125 : vector<1x128xf32>
    %129 = arith.index_cast %122 : i32 to index
    %c0_57 = arith.constant 0 : index
    %130 = vector.load %arg9[%129, %c0_57] : memref<16x128xf32, #tpu.memory_space<vmem>>, vector<1x128xf32>
    tpu.vector_store %arg9[%129, %c0_57], %128 {strides = array<i32>} : memref<16x128xf32, #tpu.memory_space<vmem>>, vector<1x128xf32>,
    %c12 = arith.constant 12 : index
    %131 = memref.load %arg1[%c12] : memref<96xi32, #tpu.memory_space<smem>>
    %c32 = arith.constant 32 : index
    %132 = memref.load %arg1[%c32] : memref<96xi32, #tpu.memory_space<smem>>
    %c0_i32_58 = arith.constant 0 : i32
    %133 = arith.addi %c0_i32_58, %131 : i32
    %134 = arith.index_cast %133 : i32 to index
    %c0_59 = arith.constant 0 : index
    %135 = vector.load %arg8[%134, %c0_59] : memref<48x128xf32, #tpu.memory_space<vmem>>, vector<1x128xf32>
    %136 = arith.index_cast %132 : i32 to index
    %c0_60 = arith.constant 0 : index
    %137 = vector.load %arg9[%136, %c0_60] : memref<16x128xf32, #tpu.memory_space<vmem>>, vector<1x128xf32>
    %138 = arith.minimumf %137, %135 : vector<1x128xf32>
    %139 = arith.index_cast %132 : i32 to index
    %c0_61 = arith.constant 0 : index
    %140 = vector.load %arg9[%139, %c0_61] : memref<16x128xf32, #tpu.memory_space<vmem>>, vector<1x128xf32>
    tpu.vector_store %arg9[%139, %c0_61], %138 {strides = array<i32>} : memref<16x128xf32, #tpu.memory_space<vmem>>, vector<1x128xf32>,
    %c13 = arith.constant 13 : index
    %141 = memref.load %arg1[%c13] : memref<96xi32, #tpu.memory_space<smem>>
    %c33 = arith.constant 33 : index
    %142 = memref.load %arg1[%c33] : memref<96xi32, #tpu.memory_space<smem>>
    %c0_i32_62 = arith.constant 0 : i32
    %143 = arith.addi %c0_i32_62, %141 : i32
    %144 = arith.index_cast %143 : i32 to index
    %c0_63 = arith.constant 0 : index
    %145 = vector.load %arg8[%144, %c0_63] : memref<48x128xf32, #tpu.memory_space<vmem>>, vector<1x128xf32>
    %146 = arith.index_cast %142 : i32 to index
    %c0_64 = arith.constant 0 : index
    %147 = vector.load %arg9[%146, %c0_64] : memref<16x128xf32, #tpu.memory_space<vmem>>, vector<1x128xf32>
    %148 = arith.minimumf %147, %145 : vector<1x128xf32>
    %149 = arith.index_cast %142 : i32 to index
    %c0_65 = arith.constant 0 : index
    %150 = vector.load %arg9[%149, %c0_65] : memref<16x128xf32, #tpu.memory_space<vmem>>, vector<1x128xf32>
    tpu.vector_store %arg9[%149, %c0_65], %148 {strides = array<i32>} : memref<16x128xf32, #tpu.memory_space<vmem>>, vector<1x128xf32>,
    %c14 = arith.constant 14 : index
    %151 = memref.load %arg1[%c14] : memref<96xi32, #tpu.memory_space<smem>>
    %c34 = arith.constant 34 : index
    %152 = memref.load %arg1[%c34] : memref<96xi32, #tpu.memory_space<smem>>
    %c0_i32_66 = arith.constant 0 : i32
    %153 = arith.addi %c0_i32_66, %151 : i32
    %154 = arith.index_cast %153 : i32 to index
    %c0_67 = arith.constant 0 : index
    %155 = vector.load %arg8[%154, %c0_67] : memref<48x128xf32, #tpu.memory_space<vmem>>, vector<1x128xf32>
    %156 = arith.index_cast %152 : i32 to index
    %c0_68 = arith.constant 0 : index
    %157 = vector.load %arg9[%156, %c0_68] : memref<16x128xf32, #tpu.memory_space<vmem>>, vector<1x128xf32>
    %158 = arith.minimumf %157, %155 : vector<1x128xf32>
    %159 = arith.index_cast %152 : i32 to index
    %c0_69 = arith.constant 0 : index
    %160 = vector.load %arg9[%159, %c0_69] : memref<16x128xf32, #tpu.memory_space<vmem>>, vector<1x128xf32>
    tpu.vector_store %arg9[%159, %c0_69], %158 {strides = array<i32>} : memref<16x128xf32, #tpu.memory_space<vmem>>, vector<1x128xf32>,
    %c15 = arith.constant 15 : index
    %161 = memref.load %arg1[%c15] : memref<96xi32, #tpu.memory_space<smem>>
    %c35 = arith.constant 35 : index
    %162 = memref.load %arg1[%c35] : memref<96xi32, #tpu.memory_space<smem>>
    %c0_i32_70 = arith.constant 0 : i32
    %163 = arith.addi %c0_i32_70, %161 : i32
    %164 = arith.index_cast %163 : i32 to index
    %c0_71 = arith.constant 0 : index
    %165 = vector.load %arg8[%164, %c0_71] : memref<48x128xf32, #tpu.memory_space<vmem>>, vector<1x128xf32>
    %166 = arith.index_cast %162 : i32 to index
    %c0_72 = arith.constant 0 : index
    %167 = vector.load %arg9[%166, %c0_72] : memref<16x128xf32, #tpu.memory_space<vmem>>, vector<1x128xf32>
    %168 = arith.minimumf %167, %165 : vector<1x128xf32>
    %169 = arith.index_cast %162 : i32 to index
    %c0_73 = arith.constant 0 : index
    %170 = vector.load %arg9[%169, %c0_73] : memref<16x128xf32, #tpu.memory_space<vmem>>, vector<1x128xf32>
    tpu.vector_store %arg9[%169, %c0_73], %168 {strides = array<i32>} : memref<16x128xf32, #tpu.memory_space<vmem>>, vector<1x128xf32>,
    %c16 = arith.constant 16 : index
    %171 = memref.load %arg1[%c16] : memref<96xi32, #tpu.memory_space<smem>>
    %c36 = arith.constant 36 : index
    %172 = memref.load %arg1[%c36] : memref<96xi32, #tpu.memory_space<smem>>
    %c0_i32_74 = arith.constant 0 : i32
    %173 = arith.addi %c0_i32_74, %171 : i32
    %174 = arith.index_cast %173 : i32 to index
    %c0_75 = arith.constant 0 : index
    %175 = vector.load %arg8[%174, %c0_75] : memref<48x128xf32, #tpu.memory_space<vmem>>, vector<1x128xf32>
    %176 = arith.index_cast %172 : i32 to index
    %c0_76 = arith.constant 0 : index
    %177 = vector.load %arg9[%176, %c0_76] : memref<16x128xf32, #tpu.memory_space<vmem>>, vector<1x128xf32>
    %178 = arith.minimumf %177, %175 : vector<1x128xf32>
    %179 = arith.index_cast %172 : i32 to index
    %c0_77 = arith.constant 0 : index
    %180 = vector.load %arg9[%179, %c0_77] : memref<16x128xf32, #tpu.memory_space<vmem>>, vector<1x128xf32>
    tpu.vector_store %arg9[%179, %c0_77], %178 {strides = array<i32>} : memref<16x128xf32, #tpu.memory_space<vmem>>, vector<1x128xf32>,
    %c17 = arith.constant 17 : index
    %181 = memref.load %arg1[%c17] : memref<96xi32, #tpu.memory_space<smem>>
    %c37 = arith.constant 37 : index
    %182 = memref.load %arg1[%c37] : memref<96xi32, #tpu.memory_space<smem>>
    %c0_i32_78 = arith.constant 0 : i32
    %183 = arith.addi %c0_i32_78, %181 : i32
    %184 = arith.index_cast %183 : i32 to index
    %c0_79 = arith.constant 0 : index
    %185 = vector.load %arg8[%184, %c0_79] : memref<48x128xf32, #tpu.memory_space<vmem>>, vector<1x128xf32>
    %186 = arith.index_cast %182 : i32 to index
    %c0_80 = arith.constant 0 : index
    %187 = vector.load %arg9[%186, %c0_80] : memref<16x128xf32, #tpu.memory_space<vmem>>, vector<1x128xf32>
    %188 = arith.minimumf %187, %185 : vector<1x128xf32>
    %189 = arith.index_cast %182 : i32 to index
    %c0_81 = arith.constant 0 : index
    %190 = vector.load %arg9[%189, %c0_81] : memref<16x128xf32, #tpu.memory_space<vmem>>, vector<1x128xf32>
    tpu.vector_store %arg9[%189, %c0_81], %188 {strides = array<i32>} : memref<16x128xf32, #tpu.memory_space<vmem>>, vector<1x128xf32>,
    %c18 = arith.constant 18 : index
    %191 = memref.load %arg1[%c18] : memref<96xi32, #tpu.memory_space<smem>>
    %c38 = arith.constant 38 : index
    %192 = memref.load %arg1[%c38] : memref<96xi32, #tpu.memory_space<smem>>
    %c0_i32_82 = arith.constant 0 : i32
    %193 = arith.addi %c0_i32_82, %191 : i32
    %194 = arith.index_cast %193 : i32 to index
    %c0_83 = arith.constant 0 : index
    %195 = vector.load %arg8[%194, %c0_83] : memref<48x128xf32, #tpu.memory_space<vmem>>, vector<1x128xf32>
    %196 = arith.index_cast %192 : i32 to index
    %c0_84 = arith.constant 0 : index
    %197 = vector.load %arg9[%196, %c0_84] : memref<16x128xf32, #tpu.memory_space<vmem>>, vector<1x128xf32>
    %198 = arith.minimumf %197, %195 : vector<1x128xf32>
    %199 = arith.index_cast %192 : i32 to index
    %c0_85 = arith.constant 0 : index
    %200 = vector.load %arg9[%199, %c0_85] : memref<16x128xf32, #tpu.memory_space<vmem>>, vector<1x128xf32>
    tpu.vector_store %arg9[%199, %c0_85], %198 {strides = array<i32>} : memref<16x128xf32, #tpu.memory_space<vmem>>, vector<1x128xf32>,
    %c19 = arith.constant 19 : index
    %201 = memref.load %arg1[%c19] : memref<96xi32, #tpu.memory_space<smem>>
    %c39 = arith.constant 39 : index
    %202 = memref.load %arg1[%c39] : memref<96xi32, #tpu.memory_space<smem>>
    %c0_i32_86 = arith.constant 0 : i32
    %203 = arith.addi %c0_i32_86, %201 : i32
    %204 = arith.index_cast %203 : i32 to index
    %c0_87 = arith.constant 0 : index
    %205 = vector.load %arg8[%204, %c0_87] : memref<48x128xf32, #tpu.memory_space<vmem>>, vector<1x128xf32>
    %206 = arith.index_cast %202 : i32 to index
    %c0_88 = arith.constant 0 : index
    %207 = vector.load %arg9[%206, %c0_88] : memref<16x128xf32, #tpu.memory_space<vmem>>, vector<1x128xf32>
    %208 = arith.minimumf %207, %205 : vector<1x128xf32>
    %209 = arith.index_cast %202 : i32 to index
    %c0_89 = arith.constant 0 : index
    %210 = vector.load %arg9[%209, %c0_89] : memref<16x128xf32, #tpu.memory_space<vmem>>, vector<1x128xf32>
    tpu.vector_store %arg9[%209, %c0_89], %208 {strides = array<i32>} : memref<16x128xf32, #tpu.memory_space<vmem>>, vector<1x128xf32>,
    %c16_90 = arith.constant 16 : index
    %c0_91 = arith.constant 0 : index
    %211 = vector.load %arg8[%c16_90, %c0_91] : memref<48x128xf32, #tpu.memory_space<vmem>>, vector<16x128xf32>
    %c0_92 = arith.constant 0 : index
    %c0_93 = arith.constant 0 : index
    %212 = vector.load %arg9[%c0_92, %c0_93] : memref<16x128xf32, #tpu.memory_space<vmem>>, vector<16x128xf32>
    %cst_94 = arith.constant 9.99999968E+37 : f32
    %213 = vector.broadcast %cst_94 : f32 to vector<16x128xf32>
    %214 = arith.cmpf olt, %212, %213 : vector<16x128xf32>
    %215 = arith.subf %211, %212 : vector<16x128xf32>
    %cst_95 = arith.constant 0.000000e+00 : f32
    %216 = vector.broadcast %cst_95 : f32 to vector<16x128xf32>
    %217 = arith.select %214, %215, %216 : vector<16x128xi1>, vector<16x128xf32>
    %c0_96 = arith.constant 0 : index
    %c0_97 = arith.constant 0 : index
    %c0_98 = arith.constant 0 : index
    %218 = vector.load %arg4[%c0_96, %c0_97, %c0_98] : memref<3x128x128xf32, #tpu.memory_space<vmem>>, vector<1x128x128xf32>
    %219 = vector.shape_cast %218 : vector<1x128x128xf32> to vector<128x128xf32>
    %cst_99 = arith.constant dense<0.000000e+00> : vector<16x128xf32>
    %220 = tpu.matmul %211, %219, %cst_99 {dimension_numbers = #tpu.dot_dimension_numbers<[1], [0], [0], [1], [0, 0, 1, 1], [], []>} : vector<16x128xf32>, vector<128x128xf32>, vector<16x128xf32> -> vector<16x128xf32>
    %c0_100 = arith.constant 0 : index
    %c0_101 = arith.constant 0 : index
    %c0_102 = arith.constant 0 : index
    %221 = vector.load %arg5[%c0_100, %c0_101, %c0_102] : memref<3x128x128xf32, #tpu.memory_space<vmem>>, vector<1x128x128xf32>
    %222 = vector.shape_cast %221 : vector<1x128x128xf32> to vector<128x128xf32>
    %cst_103 = arith.constant dense<0.000000e+00> : vector<16x128xf32>
    %223 = tpu.matmul %217, %222, %cst_103 {dimension_numbers = #tpu.dot_dimension_numbers<[1], [0], [0], [1], [0, 0, 1, 1], [], []>} : vector<16x128xf32>, vector<128x128xf32>, vector<16x128xf32> -> vector<16x128xf32>
    %224 = arith.addf %220, %223 : vector<16x128xf32>
    %c0_104 = arith.constant 0 : index
    %c0_105 = arith.constant 0 : index
    %c0_106 = arith.constant 0 : index
    %225 = vector.load %arg6[%c0_104, %c0_105, %c0_106] : memref<3x1x128xf32, #tpu.memory_space<vmem>>, vector<1x1x128xf32>
    %226 = vector.shape_cast %225 : vector<1x1x128xf32> to vector<1x128xf32>
    %227 = vector.broadcast %226 : vector<1x128xf32> to vector<16x128xf32>
    %228 = arith.addf %224, %227 : vector<16x128xf32>
    %cst_107 = arith.constant 0.000000e+00 : f32
    %229 = vector.broadcast %cst_107 : f32 to vector<16x128xf32>
    %230 = arith.cmpf ogt, %228, %229 : vector<16x128xf32>
    %cst_108 = arith.constant 0.00999999977 : f32
    %231 = vector.broadcast %cst_108 : f32 to vector<16x128xf32>
    %232 = arith.mulf %231, %228 : vector<16x128xf32>
    %233 = arith.select %230, %228, %232 : vector<16x128xi1>, vector<16x128xf32>
    %234 = arith.addf %211, %233 : vector<16x128xf32>
    %c16_109 = arith.constant 16 : index
    %c0_110 = arith.constant 0 : index
    %235 = vector.load %arg8[%c16_109, %c0_110] : memref<48x128xf32, #tpu.memory_space<vmem>>, vector<16x128xf32>
    tpu.vector_store %arg8[%c16_109, %c0_110], %234 {strides = array<i32>} : memref<48x128xf32, #tpu.memory_space<vmem>>, vector<16x128xf32>,
    %cst_111 = arith.constant 3.000000e+38 : f32
    %236 = vector.broadcast %cst_111 : f32 to vector<8x128xf32>
    %c0_112 = arith.constant 0 : index
    %c0_113 = arith.constant 0 : index
    %237 = vector.load %arg9[%c0_112, %c0_113] : memref<16x128xf32, #tpu.memory_space<vmem>>, vector<8x128xf32>
    tpu.vector_store %arg9[%c0_112, %c0_113], %236 {strides = array<i32>} : memref<16x128xf32, #tpu.memory_space<vmem>>, vector<8x128xf32>,
    %c40 = arith.constant 40 : index
    %238 = memref.load %arg1[%c40] : memref<96xi32, #tpu.memory_space<smem>>
    %c56 = arith.constant 56 : index
    %239 = memref.load %arg1[%c56] : memref<96xi32, #tpu.memory_space<smem>>
    %c16_i32 = arith.constant 16 : i32
    %240 = arith.addi %c16_i32, %238 : i32
    %241 = arith.index_cast %240 : i32 to index
    %c0_114 = arith.constant 0 : index
    %242 = vector.load %arg8[%241, %c0_114] : memref<48x128xf32, #tpu.memory_space<vmem>>, vector<1x128xf32>
    %243 = arith.index_cast %239 : i32 to index
    %c0_115 = arith.constant 0 : index
    %244 = vector.load %arg9[%243, %c0_115] : memref<16x128xf32, #tpu.memory_space<vmem>>, vector<1x128xf32>
    %245 = arith.minimumf %244, %242 : vector<1x128xf32>
    %246 = arith.index_cast %239 : i32 to index
    %c0_116 = arith.constant 0 : index
    %247 = vector.load %arg9[%246, %c0_116] : memref<16x128xf32, #tpu.memory_space<vmem>>, vector<1x128xf32>
    tpu.vector_store %arg9[%246, %c0_116], %245 {strides = array<i32>} : memref<16x128xf32, #tpu.memory_space<vmem>>, vector<1x128xf32>,
    %c41 = arith.constant 41 : index
    %248 = memref.load %arg1[%c41] : memref<96xi32, #tpu.memory_space<smem>>
    %c57 = arith.constant 57 : index
    %249 = memref.load %arg1[%c57] : memref<96xi32, #tpu.memory_space<smem>>
    %c16_i32_117 = arith.constant 16 : i32
    %250 = arith.addi %c16_i32_117, %248 : i32
    %251 = arith.index_cast %250 : i32 to index
    %c0_118 = arith.constant 0 : index
    %252 = vector.load %arg8[%251, %c0_118] : memref<48x128xf32, #tpu.memory_space<vmem>>, vector<1x128xf32>
    %253 = arith.index_cast %249 : i32 to index
    %c0_119 = arith.constant 0 : index
    %254 = vector.load %arg9[%253, %c0_119] : memref<16x128xf32, #tpu.memory_space<vmem>>, vector<1x128xf32>
    %255 = arith.minimumf %254, %252 : vector<1x128xf32>
    %256 = arith.index_cast %249 : i32 to index
    %c0_120 = arith.constant 0 : index
    %257 = vector.load %arg9[%256, %c0_120] : memref<16x128xf32, #tpu.memory_space<vmem>>, vector<1x128xf32>
    tpu.vector_store %arg9[%256, %c0_120], %255 {strides = array<i32>} : memref<16x128xf32, #tpu.memory_space<vmem>>, vector<1x128xf32>,
    %c42 = arith.constant 42 : index
    %258 = memref.load %arg1[%c42] : memref<96xi32, #tpu.memory_space<smem>>
    %c58 = arith.constant 58 : index
    %259 = memref.load %arg1[%c58] : memref<96xi32, #tpu.memory_space<smem>>
    %c16_i32_121 = arith.constant 16 : i32
    %260 = arith.addi %c16_i32_121, %258 : i32
    %261 = arith.index_cast %260 : i32 to index
    %c0_122 = arith.constant 0 : index
    %262 = vector.load %arg8[%261, %c0_122] : memref<48x128xf32, #tpu.memory_space<vmem>>, vector<1x128xf32>
    %263 = arith.index_cast %259 : i32 to index
    %c0_123 = arith.constant 0 : index
    %264 = vector.load %arg9[%263, %c0_123] : memref<16x128xf32, #tpu.memory_space<vmem>>, vector<1x128xf32>
    %265 = arith.minimumf %264, %262 : vector<1x128xf32>
    %266 = arith.index_cast %259 : i32 to index
    %c0_124 = arith.constant 0 : index
    %267 = vector.load %arg9[%266, %c0_124] : memref<16x128xf32, #tpu.memory_space<vmem>>, vector<1x128xf32>
    tpu.vector_store %arg9[%266, %c0_124], %265 {strides = array<i32>} : memref<16x128xf32, #tpu.memory_space<vmem>>, vector<1x128xf32>,
    %c43 = arith.constant 43 : index
    %268 = memref.load %arg1[%c43] : memref<96xi32, #tpu.memory_space<smem>>
    %c59 = arith.constant 59 : index
    %269 = memref.load %arg1[%c59] : memref<96xi32, #tpu.memory_space<smem>>
    %c16_i32_125 = arith.constant 16 : i32
    %270 = arith.addi %c16_i32_125, %268 : i32
    %271 = arith.index_cast %270 : i32 to index
    %c0_126 = arith.constant 0 : index
    %272 = vector.load %arg8[%271, %c0_126] : memref<48x128xf32, #tpu.memory_space<vmem>>, vector<1x128xf32>
    %273 = arith.index_cast %269 : i32 to index
    %c0_127 = arith.constant 0 : index
    %274 = vector.load %arg9[%273, %c0_127] : memref<16x128xf32, #tpu.memory_space<vmem>>, vector<1x128xf32>
    %275 = arith.minimumf %274, %272 : vector<1x128xf32>
    %276 = arith.index_cast %269 : i32 to index
    %c0_128 = arith.constant 0 : index
    %277 = vector.load %arg9[%276, %c0_128] : memref<16x128xf32, #tpu.memory_space<vmem>>, vector<1x128xf32>
    tpu.vector_store %arg9[%276, %c0_128], %275 {strides = array<i32>} : memref<16x128xf32, #tpu.memory_space<vmem>>, vector<1x128xf32>,
    %c44 = arith.constant 44 : index
    %278 = memref.load %arg1[%c44] : memref<96xi32, #tpu.memory_space<smem>>
    %c60 = arith.constant 60 : index
    %279 = memref.load %arg1[%c60] : memref<96xi32, #tpu.memory_space<smem>>
    %c16_i32_129 = arith.constant 16 : i32
    %280 = arith.addi %c16_i32_129, %278 : i32
    %281 = arith.index_cast %280 : i32 to index
    %c0_130 = arith.constant 0 : index
    %282 = vector.load %arg8[%281, %c0_130] : memref<48x128xf32, #tpu.memory_space<vmem>>, vector<1x128xf32>
    %283 = arith.index_cast %279 : i32 to index
    %c0_131 = arith.constant 0 : index
    %284 = vector.load %arg9[%283, %c0_131] : memref<16x128xf32, #tpu.memory_space<vmem>>, vector<1x128xf32>
    %285 = arith.minimumf %284, %282 : vector<1x128xf32>
    %286 = arith.index_cast %279 : i32 to index
    %c0_132 = arith.constant 0 : index
    %287 = vector.load %arg9[%286, %c0_132] : memref<16x128xf32, #tpu.memory_space<vmem>>, vector<1x128xf32>
    tpu.vector_store %arg9[%286, %c0_132], %285 {strides = array<i32>} : memref<16x128xf32, #tpu.memory_space<vmem>>, vector<1x128xf32>,
    %c45 = arith.constant 45 : index
    %288 = memref.load %arg1[%c45] : memref<96xi32, #tpu.memory_space<smem>>
    %c61 = arith.constant 61 : index
    %289 = memref.load %arg1[%c61] : memref<96xi32, #tpu.memory_space<smem>>
    %c16_i32_133 = arith.constant 16 : i32
    %290 = arith.addi %c16_i32_133, %288 : i32
    %291 = arith.index_cast %290 : i32 to index
    %c0_134 = arith.constant 0 : index
    %292 = vector.load %arg8[%291, %c0_134] : memref<48x128xf32, #tpu.memory_space<vmem>>, vector<1x128xf32>
    %293 = arith.index_cast %289 : i32 to index
    %c0_135 = arith.constant 0 : index
    %294 = vector.load %arg9[%293, %c0_135] : memref<16x128xf32, #tpu.memory_space<vmem>>, vector<1x128xf32>
    %295 = arith.minimumf %294, %292 : vector<1x128xf32>
    %296 = arith.index_cast %289 : i32 to index
    %c0_136 = arith.constant 0 : index
    %297 = vector.load %arg9[%296, %c0_136] : memref<16x128xf32, #tpu.memory_space<vmem>>, vector<1x128xf32>
    tpu.vector_store %arg9[%296, %c0_136], %295 {strides = array<i32>} : memref<16x128xf32, #tpu.memory_space<vmem>>, vector<1x128xf32>,
    %c46 = arith.constant 46 : index
    %298 = memref.load %arg1[%c46] : memref<96xi32, #tpu.memory_space<smem>>
    %c62 = arith.constant 62 : index
    %299 = memref.load %arg1[%c62] : memref<96xi32, #tpu.memory_space<smem>>
    %c16_i32_137 = arith.constant 16 : i32
    %300 = arith.addi %c16_i32_137, %298 : i32
    %301 = arith.index_cast %300 : i32 to index
    %c0_138 = arith.constant 0 : index
    %302 = vector.load %arg8[%301, %c0_138] : memref<48x128xf32, #tpu.memory_space<vmem>>, vector<1x128xf32>
    %303 = arith.index_cast %299 : i32 to index
    %c0_139 = arith.constant 0 : index
    %304 = vector.load %arg9[%303, %c0_139] : memref<16x128xf32, #tpu.memory_space<vmem>>, vector<1x128xf32>
    %305 = arith.minimumf %304, %302 : vector<1x128xf32>
    %306 = arith.index_cast %299 : i32 to index
    %c0_140 = arith.constant 0 : index
    %307 = vector.load %arg9[%306, %c0_140] : memref<16x128xf32, #tpu.memory_space<vmem>>, vector<1x128xf32>
    tpu.vector_store %arg9[%306, %c0_140], %305 {strides = array<i32>} : memref<16x128xf32, #tpu.memory_space<vmem>>, vector<1x128xf32>,
    %c47 = arith.constant 47 : index
    %308 = memref.load %arg1[%c47] : memref<96xi32, #tpu.memory_space<smem>>
    %c63 = arith.constant 63 : index
    %309 = memref.load %arg1[%c63] : memref<96xi32, #tpu.memory_space<smem>>
    %c16_i32_141 = arith.constant 16 : i32
    %310 = arith.addi %c16_i32_141, %308 : i32
    %311 = arith.index_cast %310 : i32 to index
    %c0_142 = arith.constant 0 : index
    %312 = vector.load %arg8[%311, %c0_142] : memref<48x128xf32, #tpu.memory_space<vmem>>, vector<1x128xf32>
    %313 = arith.index_cast %309 : i32 to index
    %c0_143 = arith.constant 0 : index
    %314 = vector.load %arg9[%313, %c0_143] : memref<16x128xf32, #tpu.memory_space<vmem>>, vector<1x128xf32>
    %315 = arith.minimumf %314, %312 : vector<1x128xf32>
    %316 = arith.index_cast %309 : i32 to index
    %c0_144 = arith.constant 0 : index
    %317 = vector.load %arg9[%316, %c0_144] : memref<16x128xf32, #tpu.memory_space<vmem>>, vector<1x128xf32>
    tpu.vector_store %arg9[%316, %c0_144], %315 {strides = array<i32>} : memref<16x128xf32, #tpu.memory_space<vmem>>, vector<1x128xf32>,
    %c48 = arith.constant 48 : index
    %318 = memref.load %arg1[%c48] : memref<96xi32, #tpu.memory_space<smem>>
    %c64 = arith.constant 64 : index
    %319 = memref.load %arg1[%c64] : memref<96xi32, #tpu.memory_space<smem>>
    %c16_i32_145 = arith.constant 16 : i32
    %320 = arith.addi %c16_i32_145, %318 : i32
    %321 = arith.index_cast %320 : i32 to index
    %c0_146 = arith.constant 0 : index
    %322 = vector.load %arg8[%321, %c0_146] : memref<48x128xf32, #tpu.memory_space<vmem>>, vector<1x128xf32>
    %323 = arith.index_cast %319 : i32 to index
    %c0_147 = arith.constant 0 : index
    %324 = vector.load %arg9[%323, %c0_147] : memref<16x128xf32, #tpu.memory_space<vmem>>, vector<1x128xf32>
    %325 = arith.minimumf %324, %322 : vector<1x128xf32>
    %326 = arith.index_cast %319 : i32 to index
    %c0_148 = arith.constant 0 : index
    %327 = vector.load %arg9[%326, %c0_148] : memref<16x128xf32, #tpu.memory_space<vmem>>, vector<1x128xf32>
    tpu.vector_store %arg9[%326, %c0_148], %325 {strides = array<i32>} : memref<16x128xf32, #tpu.memory_space<vmem>>, vector<1x128xf32>,
    %c49 = arith.constant 49 : index
    %328 = memref.load %arg1[%c49] : memref<96xi32, #tpu.memory_space<smem>>
    %c65 = arith.constant 65 : index
    %329 = memref.load %arg1[%c65] : memref<96xi32, #tpu.memory_space<smem>>
    %c16_i32_149 = arith.constant 16 : i32
    %330 = arith.addi %c16_i32_149, %328 : i32
    %331 = arith.index_cast %330 : i32 to index
    %c0_150 = arith.constant 0 : index
    %332 = vector.load %arg8[%331, %c0_150] : memref<48x128xf32, #tpu.memory_space<vmem>>, vector<1x128xf32>
    %333 = arith.index_cast %329 : i32 to index
    %c0_151 = arith.constant 0 : index
    %334 = vector.load %arg9[%333, %c0_151] : memref<16x128xf32, #tpu.memory_space<vmem>>, vector<1x128xf32>
    %335 = arith.minimumf %334, %332 : vector<1x128xf32>
    %336 = arith.index_cast %329 : i32 to index
    %c0_152 = arith.constant 0 : index
    %337 = vector.load %arg9[%336, %c0_152] : memref<16x128xf32, #tpu.memory_space<vmem>>, vector<1x128xf32>
    tpu.vector_store %arg9[%336, %c0_152], %335 {strides = array<i32>} : memref<16x128xf32, #tpu.memory_space<vmem>>, vector<1x128xf32>,
    %c50 = arith.constant 50 : index
    %338 = memref.load %arg1[%c50] : memref<96xi32, #tpu.memory_space<smem>>
    %c66 = arith.constant 66 : index
    %339 = memref.load %arg1[%c66] : memref<96xi32, #tpu.memory_space<smem>>
    %c16_i32_153 = arith.constant 16 : i32
    %340 = arith.addi %c16_i32_153, %338 : i32
    %341 = arith.index_cast %340 : i32 to index
    %c0_154 = arith.constant 0 : index
    %342 = vector.load %arg8[%341, %c0_154] : memref<48x128xf32, #tpu.memory_space<vmem>>, vector<1x128xf32>
    %343 = arith.index_cast %339 : i32 to index
    %c0_155 = arith.constant 0 : index
    %344 = vector.load %arg9[%343, %c0_155] : memref<16x128xf32, #tpu.memory_space<vmem>>, vector<1x128xf32>
    %345 = arith.minimumf %344, %342 : vector<1x128xf32>
    %346 = arith.index_cast %339 : i32 to index
    %c0_156 = arith.constant 0 : index
    %347 = vector.load %arg9[%346, %c0_156] : memref<16x128xf32, #tpu.memory_space<vmem>>, vector<1x128xf32>
    tpu.vector_store %arg9[%346, %c0_156], %345 {strides = array<i32>} : memref<16x128xf32, #tpu.memory_space<vmem>>, vector<1x128xf32>,
    %c51 = arith.constant 51 : index
    %348 = memref.load %arg1[%c51] : memref<96xi32, #tpu.memory_space<smem>>
    %c67 = arith.constant 67 : index
    %349 = memref.load %arg1[%c67] : memref<96xi32, #tpu.memory_space<smem>>
    %c16_i32_157 = arith.constant 16 : i32
    %350 = arith.addi %c16_i32_157, %348 : i32
    %351 = arith.index_cast %350 : i32 to index
    %c0_158 = arith.constant 0 : index
    %352 = vector.load %arg8[%351, %c0_158] : memref<48x128xf32, #tpu.memory_space<vmem>>, vector<1x128xf32>
    %353 = arith.index_cast %349 : i32 to index
    %c0_159 = arith.constant 0 : index
    %354 = vector.load %arg9[%353, %c0_159] : memref<16x128xf32, #tpu.memory_space<vmem>>, vector<1x128xf32>
    %355 = arith.minimumf %354, %352 : vector<1x128xf32>
    %356 = arith.index_cast %349 : i32 to index
    %c0_160 = arith.constant 0 : index
    %357 = vector.load %arg9[%356, %c0_160] : memref<16x128xf32, #tpu.memory_space<vmem>>, vector<1x128xf32>
    tpu.vector_store %arg9[%356, %c0_160], %355 {strides = array<i32>} : memref<16x128xf32, #tpu.memory_space<vmem>>, vector<1x128xf32>,
    %c52 = arith.constant 52 : index
    %358 = memref.load %arg1[%c52] : memref<96xi32, #tpu.memory_space<smem>>
    %c68 = arith.constant 68 : index
    %359 = memref.load %arg1[%c68] : memref<96xi32, #tpu.memory_space<smem>>
    %c16_i32_161 = arith.constant 16 : i32
    %360 = arith.addi %c16_i32_161, %358 : i32
    %361 = arith.index_cast %360 : i32 to index
    %c0_162 = arith.constant 0 : index
    %362 = vector.load %arg8[%361, %c0_162] : memref<48x128xf32, #tpu.memory_space<vmem>>, vector<1x128xf32>
    %363 = arith.index_cast %359 : i32 to index
    %c0_163 = arith.constant 0 : index
    %364 = vector.load %arg9[%363, %c0_163] : memref<16x128xf32, #tpu.memory_space<vmem>>, vector<1x128xf32>
    %365 = arith.minimumf %364, %362 : vector<1x128xf32>
    %366 = arith.index_cast %359 : i32 to index
    %c0_164 = arith.constant 0 : index
    %367 = vector.load %arg9[%366, %c0_164] : memref<16x128xf32, #tpu.memory_space<vmem>>, vector<1x128xf32>
    tpu.vector_store %arg9[%366, %c0_164], %365 {strides = array<i32>} : memref<16x128xf32, #tpu.memory_space<vmem>>, vector<1x128xf32>,
    %c53 = arith.constant 53 : index
    %368 = memref.load %arg1[%c53] : memref<96xi32, #tpu.memory_space<smem>>
    %c69 = arith.constant 69 : index
    %369 = memref.load %arg1[%c69] : memref<96xi32, #tpu.memory_space<smem>>
    %c16_i32_165 = arith.constant 16 : i32
    %370 = arith.addi %c16_i32_165, %368 : i32
    %371 = arith.index_cast %370 : i32 to index
    %c0_166 = arith.constant 0 : index
    %372 = vector.load %arg8[%371, %c0_166] : memref<48x128xf32, #tpu.memory_space<vmem>>, vector<1x128xf32>
    %373 = arith.index_cast %369 : i32 to index
    %c0_167 = arith.constant 0 : index
    %374 = vector.load %arg9[%373, %c0_167] : memref<16x128xf32, #tpu.memory_space<vmem>>, vector<1x128xf32>
    %375 = arith.minimumf %374, %372 : vector<1x128xf32>
    %376 = arith.index_cast %369 : i32 to index
    %c0_168 = arith.constant 0 : index
    %377 = vector.load %arg9[%376, %c0_168] : memref<16x128xf32, #tpu.memory_space<vmem>>, vector<1x128xf32>
    tpu.vector_store %arg9[%376, %c0_168], %375 {strides = array<i32>} : memref<16x128xf32, #tpu.memory_space<vmem>>, vector<1x128xf32>,
    %c54 = arith.constant 54 : index
    %378 = memref.load %arg1[%c54] : memref<96xi32, #tpu.memory_space<smem>>
    %c70 = arith.constant 70 : index
    %379 = memref.load %arg1[%c70] : memref<96xi32, #tpu.memory_space<smem>>
    %c16_i32_169 = arith.constant 16 : i32
    %380 = arith.addi %c16_i32_169, %378 : i32
    %381 = arith.index_cast %380 : i32 to index
    %c0_170 = arith.constant 0 : index
    %382 = vector.load %arg8[%381, %c0_170] : memref<48x128xf32, #tpu.memory_space<vmem>>, vector<1x128xf32>
    %383 = arith.index_cast %379 : i32 to index
    %c0_171 = arith.constant 0 : index
    %384 = vector.load %arg9[%383, %c0_171] : memref<16x128xf32, #tpu.memory_space<vmem>>, vector<1x128xf32>
    %385 = arith.minimumf %384, %382 : vector<1x128xf32>
    %386 = arith.index_cast %379 : i32 to index
    %c0_172 = arith.constant 0 : index
    %387 = vector.load %arg9[%386, %c0_172] : memref<16x128xf32, #tpu.memory_space<vmem>>, vector<1x128xf32>
    tpu.vector_store %arg9[%386, %c0_172], %385 {strides = array<i32>} : memref<16x128xf32, #tpu.memory_space<vmem>>, vector<1x128xf32>,
    %c55 = arith.constant 55 : index
    %388 = memref.load %arg1[%c55] : memref<96xi32, #tpu.memory_space<smem>>
    %c71 = arith.constant 71 : index
    %389 = memref.load %arg1[%c71] : memref<96xi32, #tpu.memory_space<smem>>
    %c16_i32_173 = arith.constant 16 : i32
    %390 = arith.addi %c16_i32_173, %388 : i32
    %391 = arith.index_cast %390 : i32 to index
    %c0_174 = arith.constant 0 : index
    %392 = vector.load %arg8[%391, %c0_174] : memref<48x128xf32, #tpu.memory_space<vmem>>, vector<1x128xf32>
    %393 = arith.index_cast %389 : i32 to index
    %c0_175 = arith.constant 0 : index
    %394 = vector.load %arg9[%393, %c0_175] : memref<16x128xf32, #tpu.memory_space<vmem>>, vector<1x128xf32>
    %395 = arith.minimumf %394, %392 : vector<1x128xf32>
    %396 = arith.index_cast %389 : i32 to index
    %c0_176 = arith.constant 0 : index
    %397 = vector.load %arg9[%396, %c0_176] : memref<16x128xf32, #tpu.memory_space<vmem>>, vector<1x128xf32>
    tpu.vector_store %arg9[%396, %c0_176], %395 {strides = array<i32>} : memref<16x128xf32, #tpu.memory_space<vmem>>, vector<1x128xf32>,
    %c32_177 = arith.constant 32 : index
    %c0_178 = arith.constant 0 : index
    %398 = vector.load %arg8[%c32_177, %c0_178] : memref<48x128xf32, #tpu.memory_space<vmem>>, vector<8x128xf32>
    %c0_179 = arith.constant 0 : index
    %c0_180 = arith.constant 0 : index
    %399 = vector.load %arg9[%c0_179, %c0_180] : memref<16x128xf32, #tpu.memory_space<vmem>>, vector<8x128xf32>
    %cst_181 = arith.constant 9.99999968E+37 : f32
    %400 = vector.broadcast %cst_181 : f32 to vector<8x128xf32>
    %401 = arith.cmpf olt, %399, %400 : vector<8x128xf32>
    %402 = arith.subf %398, %399 : vector<8x128xf32>
    %cst_182 = arith.constant 0.000000e+00 : f32
    %403 = vector.broadcast %cst_182 : f32 to vector<8x128xf32>
    %404 = arith.select %401, %402, %403 : vector<8x128xi1>, vector<8x128xf32>
    %c1_183 = arith.constant 1 : index
    %c0_184 = arith.constant 0 : index
    %c0_185 = arith.constant 0 : index
    %405 = vector.load %arg4[%c1_183, %c0_184, %c0_185] : memref<3x128x128xf32, #tpu.memory_space<vmem>>, vector<1x128x128xf32>
    %406 = vector.shape_cast %405 : vector<1x128x128xf32> to vector<128x128xf32>
    %cst_186 = arith.constant dense<0.000000e+00> : vector<8x128xf32>
    %407 = tpu.matmul %398, %406, %cst_186 {dimension_numbers = #tpu.dot_dimension_numbers<[1], [0], [0], [1], [0, 0, 1, 1], [], []>} : vector<8x128xf32>, vector<128x128xf32>, vector<8x128xf32> -> vector<8x128xf32>
    %c1_187 = arith.constant 1 : index
    %c0_188 = arith.constant 0 : index
    %c0_189 = arith.constant 0 : index
    %408 = vector.load %arg5[%c1_187, %c0_188, %c0_189] : memref<3x128x128xf32, #tpu.memory_space<vmem>>, vector<1x128x128xf32>
    %409 = vector.shape_cast %408 : vector<1x128x128xf32> to vector<128x128xf32>
    %cst_190 = arith.constant dense<0.000000e+00> : vector<8x128xf32>
    %410 = tpu.matmul %404, %409, %cst_190 {dimension_numbers = #tpu.dot_dimension_numbers<[1], [0], [0], [1], [0, 0, 1, 1], [], []>} : vector<8x128xf32>, vector<128x128xf32>, vector<8x128xf32> -> vector<8x128xf32>
    %411 = arith.addf %407, %410 : vector<8x128xf32>
    %c1_191 = arith.constant 1 : index
    %c0_192 = arith.constant 0 : index
    %c0_193 = arith.constant 0 : index
    %412 = vector.load %arg6[%c1_191, %c0_192, %c0_193] : memref<3x1x128xf32, #tpu.memory_space<vmem>>, vector<1x1x128xf32>
    %413 = vector.shape_cast %412 : vector<1x1x128xf32> to vector<1x128xf32>
    %414 = vector.broadcast %413 : vector<1x128xf32> to vector<8x128xf32>
    %415 = arith.addf %411, %414 : vector<8x128xf32>
    %cst_194 = arith.constant 0.000000e+00 : f32
    %416 = vector.broadcast %cst_194 : f32 to vector<8x128xf32>
    %417 = arith.cmpf ogt, %415, %416 : vector<8x128xf32>
    %cst_195 = arith.constant 0.00999999977 : f32
    %418 = vector.broadcast %cst_195 : f32 to vector<8x128xf32>
    %419 = arith.mulf %418, %415 : vector<8x128xf32>
    %420 = arith.select %417, %415, %419 : vector<8x128xi1>, vector<8x128xf32>
    %421 = arith.addf %398, %420 : vector<8x128xf32>
    %c32_196 = arith.constant 32 : index
    %c0_197 = arith.constant 0 : index
    %422 = vector.load %arg8[%c32_196, %c0_197] : memref<48x128xf32, #tpu.memory_space<vmem>>, vector<8x128xf32>
    tpu.vector_store %arg8[%c32_196, %c0_197], %421 {strides = array<i32>} : memref<48x128xf32, #tpu.memory_space<vmem>>, vector<8x128xf32>,
    %cst_198 = arith.constant 3.000000e+38 : f32
    %423 = vector.broadcast %cst_198 : f32 to vector<8x128xf32>
    %c0_199 = arith.constant 0 : index
    %c0_200 = arith.constant 0 : index
    %424 = vector.load %arg9[%c0_199, %c0_200] : memref<16x128xf32, #tpu.memory_space<vmem>>, vector<8x128xf32>
    tpu.vector_store %arg9[%c0_199, %c0_200], %423 {strides = array<i32>} : memref<16x128xf32, #tpu.memory_space<vmem>>, vector<8x128xf32>,
    %c72 = arith.constant 72 : index
    %425 = memref.load %arg1[%c72] : memref<96xi32, #tpu.memory_space<smem>>
    %c84 = arith.constant 84 : index
    %426 = memref.load %arg1[%c84] : memref<96xi32, #tpu.memory_space<smem>>
    %c32_i32 = arith.constant 32 : i32
    %427 = arith.addi %c32_i32, %425 : i32
    %428 = arith.index_cast %427 : i32 to index
    %c0_201 = arith.constant 0 : index
    %429 = vector.load %arg8[%428, %c0_201] : memref<48x128xf32, #tpu.memory_space<vmem>>, vector<1x128xf32>
    %430 = arith.index_cast %426 : i32 to index
    %c0_202 = arith.constant 0 : index
    %431 = vector.load %arg9[%430, %c0_202] : memref<16x128xf32, #tpu.memory_space<vmem>>, vector<1x128xf32>
    %432 = arith.minimumf %431, %429 : vector<1x128xf32>
    %433 = arith.index_cast %426 : i32 to index
    %c0_203 = arith.constant 0 : index
    %434 = vector.load %arg9[%433, %c0_203] : memref<16x128xf32, #tpu.memory_space<vmem>>, vector<1x128xf32>
    tpu.vector_store %arg9[%433, %c0_203], %432 {strides = array<i32>} : memref<16x128xf32, #tpu.memory_space<vmem>>, vector<1x128xf32>,
    %c73 = arith.constant 73 : index
    %435 = memref.load %arg1[%c73] : memref<96xi32, #tpu.memory_space<smem>>
    %c85 = arith.constant 85 : index
    %436 = memref.load %arg1[%c85] : memref<96xi32, #tpu.memory_space<smem>>
    %c32_i32_204 = arith.constant 32 : i32
    %437 = arith.addi %c32_i32_204, %435 : i32
    %438 = arith.index_cast %437 : i32 to index
    %c0_205 = arith.constant 0 : index
    %439 = vector.load %arg8[%438, %c0_205] : memref<48x128xf32, #tpu.memory_space<vmem>>, vector<1x128xf32>
    %440 = arith.index_cast %436 : i32 to index
    %c0_206 = arith.constant 0 : index
    %441 = vector.load %arg9[%440, %c0_206] : memref<16x128xf32, #tpu.memory_space<vmem>>, vector<1x128xf32>
    %442 = arith.minimumf %441, %439 : vector<1x128xf32>
    %443 = arith.index_cast %436 : i32 to index
    %c0_207 = arith.constant 0 : index
    %444 = vector.load %arg9[%443, %c0_207] : memref<16x128xf32, #tpu.memory_space<vmem>>, vector<1x128xf32>
    tpu.vector_store %arg9[%443, %c0_207], %442 {strides = array<i32>} : memref<16x128xf32, #tpu.memory_space<vmem>>, vector<1x128xf32>,
    %c74 = arith.constant 74 : index
    %445 = memref.load %arg1[%c74] : memref<96xi32, #tpu.memory_space<smem>>
    %c86 = arith.constant 86 : index
    %446 = memref.load %arg1[%c86] : memref<96xi32, #tpu.memory_space<smem>>
    %c32_i32_208 = arith.constant 32 : i32
    %447 = arith.addi %c32_i32_208, %445 : i32
    %448 = arith.index_cast %447 : i32 to index
    %c0_209 = arith.constant 0 : index
    %449 = vector.load %arg8[%448, %c0_209] : memref<48x128xf32, #tpu.memory_space<vmem>>, vector<1x128xf32>
    %450 = arith.index_cast %446 : i32 to index
    %c0_210 = arith.constant 0 : index
    %451 = vector.load %arg9[%450, %c0_210] : memref<16x128xf32, #tpu.memory_space<vmem>>, vector<1x128xf32>
    %452 = arith.minimumf %451, %449 : vector<1x128xf32>
    %453 = arith.index_cast %446 : i32 to index
    %c0_211 = arith.constant 0 : index
    %454 = vector.load %arg9[%453, %c0_211] : memref<16x128xf32, #tpu.memory_space<vmem>>, vector<1x128xf32>
    tpu.vector_store %arg9[%453, %c0_211], %452 {strides = array<i32>} : memref<16x128xf32, #tpu.memory_space<vmem>>, vector<1x128xf32>,
    %c75 = arith.constant 75 : index
    %455 = memref.load %arg1[%c75] : memref<96xi32, #tpu.memory_space<smem>>
    %c87 = arith.constant 87 : index
    %456 = memref.load %arg1[%c87] : memref<96xi32, #tpu.memory_space<smem>>
    %c32_i32_212 = arith.constant 32 : i32
    %457 = arith.addi %c32_i32_212, %455 : i32
    %458 = arith.index_cast %457 : i32 to index
    %c0_213 = arith.constant 0 : index
    %459 = vector.load %arg8[%458, %c0_213] : memref<48x128xf32, #tpu.memory_space<vmem>>, vector<1x128xf32>
    %460 = arith.index_cast %456 : i32 to index
    %c0_214 = arith.constant 0 : index
    %461 = vector.load %arg9[%460, %c0_214] : memref<16x128xf32, #tpu.memory_space<vmem>>, vector<1x128xf32>
    %462 = arith.minimumf %461, %459 : vector<1x128xf32>
    %463 = arith.index_cast %456 : i32 to index
    %c0_215 = arith.constant 0 : index
    %464 = vector.load %arg9[%463, %c0_215] : memref<16x128xf32, #tpu.memory_space<vmem>>, vector<1x128xf32>
    tpu.vector_store %arg9[%463, %c0_215], %462 {strides = array<i32>} : memref<16x128xf32, #tpu.memory_space<vmem>>, vector<1x128xf32>,
    %c76 = arith.constant 76 : index
    %465 = memref.load %arg1[%c76] : memref<96xi32, #tpu.memory_space<smem>>
    %c88 = arith.constant 88 : index
    %466 = memref.load %arg1[%c88] : memref<96xi32, #tpu.memory_space<smem>>
    %c32_i32_216 = arith.constant 32 : i32
    %467 = arith.addi %c32_i32_216, %465 : i32
    %468 = arith.index_cast %467 : i32 to index
    %c0_217 = arith.constant 0 : index
    %469 = vector.load %arg8[%468, %c0_217] : memref<48x128xf32, #tpu.memory_space<vmem>>, vector<1x128xf32>
    %470 = arith.index_cast %466 : i32 to index
    %c0_218 = arith.constant 0 : index
    %471 = vector.load %arg9[%470, %c0_218] : memref<16x128xf32, #tpu.memory_space<vmem>>, vector<1x128xf32>
    %472 = arith.minimumf %471, %469 : vector<1x128xf32>
    %473 = arith.index_cast %466 : i32 to index
    %c0_219 = arith.constant 0 : index
    %474 = vector.load %arg9[%473, %c0_219] : memref<16x128xf32, #tpu.memory_space<vmem>>, vector<1x128xf32>
    tpu.vector_store %arg9[%473, %c0_219], %472 {strides = array<i32>} : memref<16x128xf32, #tpu.memory_space<vmem>>, vector<1x128xf32>,
    %c77 = arith.constant 77 : index
    %475 = memref.load %arg1[%c77] : memref<96xi32, #tpu.memory_space<smem>>
    %c89 = arith.constant 89 : index
    %476 = memref.load %arg1[%c89] : memref<96xi32, #tpu.memory_space<smem>>
    %c32_i32_220 = arith.constant 32 : i32
    %477 = arith.addi %c32_i32_220, %475 : i32
    %478 = arith.index_cast %477 : i32 to index
    %c0_221 = arith.constant 0 : index
    %479 = vector.load %arg8[%478, %c0_221] : memref<48x128xf32, #tpu.memory_space<vmem>>, vector<1x128xf32>
    %480 = arith.index_cast %476 : i32 to index
    %c0_222 = arith.constant 0 : index
    %481 = vector.load %arg9[%480, %c0_222] : memref<16x128xf32, #tpu.memory_space<vmem>>, vector<1x128xf32>
    %482 = arith.minimumf %481, %479 : vector<1x128xf32>
    %483 = arith.index_cast %476 : i32 to index
    %c0_223 = arith.constant 0 : index
    %484 = vector.load %arg9[%483, %c0_223] : memref<16x128xf32, #tpu.memory_space<vmem>>, vector<1x128xf32>
    tpu.vector_store %arg9[%483, %c0_223], %482 {strides = array<i32>} : memref<16x128xf32, #tpu.memory_space<vmem>>, vector<1x128xf32>,
    %c78 = arith.constant 78 : index
    %485 = memref.load %arg1[%c78] : memref<96xi32, #tpu.memory_space<smem>>
    %c90 = arith.constant 90 : index
    %486 = memref.load %arg1[%c90] : memref<96xi32, #tpu.memory_space<smem>>
    %c32_i32_224 = arith.constant 32 : i32
    %487 = arith.addi %c32_i32_224, %485 : i32
    %488 = arith.index_cast %487 : i32 to index
    %c0_225 = arith.constant 0 : index
    %489 = vector.load %arg8[%488, %c0_225] : memref<48x128xf32, #tpu.memory_space<vmem>>, vector<1x128xf32>
    %490 = arith.index_cast %486 : i32 to index
    %c0_226 = arith.constant 0 : index
    %491 = vector.load %arg9[%490, %c0_226] : memref<16x128xf32, #tpu.memory_space<vmem>>, vector<1x128xf32>
    %492 = arith.minimumf %491, %489 : vector<1x128xf32>
    %493 = arith.index_cast %486 : i32 to index
    %c0_227 = arith.constant 0 : index
    %494 = vector.load %arg9[%493, %c0_227] : memref<16x128xf32, #tpu.memory_space<vmem>>, vector<1x128xf32>
    tpu.vector_store %arg9[%493, %c0_227], %492 {strides = array<i32>} : memref<16x128xf32, #tpu.memory_space<vmem>>, vector<1x128xf32>,
    %c79 = arith.constant 79 : index
    %495 = memref.load %arg1[%c79] : memref<96xi32, #tpu.memory_space<smem>>
    %c91 = arith.constant 91 : index
    %496 = memref.load %arg1[%c91] : memref<96xi32, #tpu.memory_space<smem>>
    %c32_i32_228 = arith.constant 32 : i32
    %497 = arith.addi %c32_i32_228, %495 : i32
    %498 = arith.index_cast %497 : i32 to index
    %c0_229 = arith.constant 0 : index
    %499 = vector.load %arg8[%498, %c0_229] : memref<48x128xf32, #tpu.memory_space<vmem>>, vector<1x128xf32>
    %500 = arith.index_cast %496 : i32 to index
    %c0_230 = arith.constant 0 : index
    %501 = vector.load %arg9[%500, %c0_230] : memref<16x128xf32, #tpu.memory_space<vmem>>, vector<1x128xf32>
    %502 = arith.minimumf %501, %499 : vector<1x128xf32>
    %503 = arith.index_cast %496 : i32 to index
    %c0_231 = arith.constant 0 : index
    %504 = vector.load %arg9[%503, %c0_231] : memref<16x128xf32, #tpu.memory_space<vmem>>, vector<1x128xf32>
    tpu.vector_store %arg9[%503, %c0_231], %502 {strides = array<i32>} : memref<16x128xf32, #tpu.memory_space<vmem>>, vector<1x128xf32>,
    %c80 = arith.constant 80 : index
    %505 = memref.load %arg1[%c80] : memref<96xi32, #tpu.memory_space<smem>>
    %c92 = arith.constant 92 : index
    %506 = memref.load %arg1[%c92] : memref<96xi32, #tpu.memory_space<smem>>
    %c32_i32_232 = arith.constant 32 : i32
    %507 = arith.addi %c32_i32_232, %505 : i32
    %508 = arith.index_cast %507 : i32 to index
    %c0_233 = arith.constant 0 : index
    %509 = vector.load %arg8[%508, %c0_233] : memref<48x128xf32, #tpu.memory_space<vmem>>, vector<1x128xf32>
    %510 = arith.index_cast %506 : i32 to index
    %c0_234 = arith.constant 0 : index
    %511 = vector.load %arg9[%510, %c0_234] : memref<16x128xf32, #tpu.memory_space<vmem>>, vector<1x128xf32>
    %512 = arith.minimumf %511, %509 : vector<1x128xf32>
    %513 = arith.index_cast %506 : i32 to index
    %c0_235 = arith.constant 0 : index
    %514 = vector.load %arg9[%513, %c0_235] : memref<16x128xf32, #tpu.memory_space<vmem>>, vector<1x128xf32>
    tpu.vector_store %arg9[%513, %c0_235], %512 {strides = array<i32>} : memref<16x128xf32, #tpu.memory_space<vmem>>, vector<1x128xf32>,
    %c81 = arith.constant 81 : index
    %515 = memref.load %arg1[%c81] : memref<96xi32, #tpu.memory_space<smem>>
    %c93 = arith.constant 93 : index
    %516 = memref.load %arg1[%c93] : memref<96xi32, #tpu.memory_space<smem>>
    %c32_i32_236 = arith.constant 32 : i32
    %517 = arith.addi %c32_i32_236, %515 : i32
    %518 = arith.index_cast %517 : i32 to index
    %c0_237 = arith.constant 0 : index
    %519 = vector.load %arg8[%518, %c0_237] : memref<48x128xf32, #tpu.memory_space<vmem>>, vector<1x128xf32>
    %520 = arith.index_cast %516 : i32 to index
    %c0_238 = arith.constant 0 : index
    %521 = vector.load %arg9[%520, %c0_238] : memref<16x128xf32, #tpu.memory_space<vmem>>, vector<1x128xf32>
    %522 = arith.minimumf %521, %519 : vector<1x128xf32>
    %523 = arith.index_cast %516 : i32 to index
    %c0_239 = arith.constant 0 : index
    %524 = vector.load %arg9[%523, %c0_239] : memref<16x128xf32, #tpu.memory_space<vmem>>, vector<1x128xf32>
    tpu.vector_store %arg9[%523, %c0_239], %522 {strides = array<i32>} : memref<16x128xf32, #tpu.memory_space<vmem>>, vector<1x128xf32>,
    %c82 = arith.constant 82 : index
    %525 = memref.load %arg1[%c82] : memref<96xi32, #tpu.memory_space<smem>>
    %c94 = arith.constant 94 : index
    %526 = memref.load %arg1[%c94] : memref<96xi32, #tpu.memory_space<smem>>
    %c32_i32_240 = arith.constant 32 : i32
    %527 = arith.addi %c32_i32_240, %525 : i32
    %528 = arith.index_cast %527 : i32 to index
    %c0_241 = arith.constant 0 : index
    %529 = vector.load %arg8[%528, %c0_241] : memref<48x128xf32, #tpu.memory_space<vmem>>, vector<1x128xf32>
    %530 = arith.index_cast %526 : i32 to index
    %c0_242 = arith.constant 0 : index
    %531 = vector.load %arg9[%530, %c0_242] : memref<16x128xf32, #tpu.memory_space<vmem>>, vector<1x128xf32>
    %532 = arith.minimumf %531, %529 : vector<1x128xf32>
    %533 = arith.index_cast %526 : i32 to index
    %c0_243 = arith.constant 0 : index
    %534 = vector.load %arg9[%533, %c0_243] : memref<16x128xf32, #tpu.memory_space<vmem>>, vector<1x128xf32>
    tpu.vector_store %arg9[%533, %c0_243], %532 {strides = array<i32>} : memref<16x128xf32, #tpu.memory_space<vmem>>, vector<1x128xf32>,
    %c83 = arith.constant 83 : index
    %535 = memref.load %arg1[%c83] : memref<96xi32, #tpu.memory_space<smem>>
    %c95 = arith.constant 95 : index
    %536 = memref.load %arg1[%c95] : memref<96xi32, #tpu.memory_space<smem>>
    %c32_i32_244 = arith.constant 32 : i32
    %537 = arith.addi %c32_i32_244, %535 : i32
    %538 = arith.index_cast %537 : i32 to index
    %c0_245 = arith.constant 0 : index
    %539 = vector.load %arg8[%538, %c0_245] : memref<48x128xf32, #tpu.memory_space<vmem>>, vector<1x128xf32>
    %540 = arith.index_cast %536 : i32 to index
    %c0_246 = arith.constant 0 : index
    %541 = vector.load %arg9[%540, %c0_246] : memref<16x128xf32, #tpu.memory_space<vmem>>, vector<1x128xf32>
    %542 = arith.minimumf %541, %539 : vector<1x128xf32>
    %543 = arith.index_cast %536 : i32 to index
    %c0_247 = arith.constant 0 : index
    %544 = vector.load %arg9[%543, %c0_247] : memref<16x128xf32, #tpu.memory_space<vmem>>, vector<1x128xf32>
    tpu.vector_store %arg9[%543, %c0_247], %542 {strides = array<i32>} : memref<16x128xf32, #tpu.memory_space<vmem>>, vector<1x128xf32>,
    %c40_248 = arith.constant 40 : index
    %c0_249 = arith.constant 0 : index
    %545 = vector.load %arg8[%c40_248, %c0_249] : memref<48x128xf32, #tpu.memory_space<vmem>>, vector<8x128xf32>
    %c0_250 = arith.constant 0 : index
    %c0_251 = arith.constant 0 : index
    %546 = vector.load %arg9[%c0_250, %c0_251] : memref<16x128xf32, #tpu.memory_space<vmem>>, vector<8x128xf32>
    %cst_252 = arith.constant 9.99999968E+37 : f32
    %547 = vector.broadcast %cst_252 : f32 to vector<8x128xf32>
    %548 = arith.cmpf olt, %546, %547 : vector<8x128xf32>
    %549 = arith.subf %545, %546 : vector<8x128xf32>
    %cst_253 = arith.constant 0.000000e+00 : f32
    %550 = vector.broadcast %cst_253 : f32 to vector<8x128xf32>
    %551 = arith.select %548, %549, %550 : vector<8x128xi1>, vector<8x128xf32>
    %c2_254 = arith.constant 2 : index
    %c0_255 = arith.constant 0 : index
    %c0_256 = arith.constant 0 : index
    %552 = vector.load %arg4[%c2_254, %c0_255, %c0_256] : memref<3x128x128xf32, #tpu.memory_space<vmem>>, vector<1x128x128xf32>
    %553 = vector.shape_cast %552 : vector<1x128x128xf32> to vector<128x128xf32>
    %cst_257 = arith.constant dense<0.000000e+00> : vector<8x128xf32>
    %554 = tpu.matmul %545, %553, %cst_257 {dimension_numbers = #tpu.dot_dimension_numbers<[1], [0], [0], [1], [0, 0, 1, 1], [], []>} : vector<8x128xf32>, vector<128x128xf32>, vector<8x128xf32> -> vector<8x128xf32>
    %c2_258 = arith.constant 2 : index
    %c0_259 = arith.constant 0 : index
    %c0_260 = arith.constant 0 : index
    %555 = vector.load %arg5[%c2_258, %c0_259, %c0_260] : memref<3x128x128xf32, #tpu.memory_space<vmem>>, vector<1x128x128xf32>
    %556 = vector.shape_cast %555 : vector<1x128x128xf32> to vector<128x128xf32>
    %cst_261 = arith.constant dense<0.000000e+00> : vector<8x128xf32>
    %557 = tpu.matmul %551, %556, %cst_261 {dimension_numbers = #tpu.dot_dimension_numbers<[1], [0], [0], [1], [0, 0, 1, 1], [], []>} : vector<8x128xf32>, vector<128x128xf32>, vector<8x128xf32> -> vector<8x128xf32>
    %558 = arith.addf %554, %557 : vector<8x128xf32>
    %c2_262 = arith.constant 2 : index
    %c0_263 = arith.constant 0 : index
    %c0_264 = arith.constant 0 : index
    %559 = vector.load %arg6[%c2_262, %c0_263, %c0_264] : memref<3x1x128xf32, #tpu.memory_space<vmem>>, vector<1x1x128xf32>
    %560 = vector.shape_cast %559 : vector<1x1x128xf32> to vector<1x128xf32>
    %561 = vector.broadcast %560 : vector<1x128xf32> to vector<8x128xf32>
    %562 = arith.addf %558, %561 : vector<8x128xf32>
    %cst_265 = arith.constant 0.000000e+00 : f32
    %563 = vector.broadcast %cst_265 : f32 to vector<8x128xf32>
    %564 = arith.cmpf ogt, %562, %563 : vector<8x128xf32>
    %cst_266 = arith.constant 0.00999999977 : f32
    %565 = vector.broadcast %cst_266 : f32 to vector<8x128xf32>
    %566 = arith.mulf %565, %562 : vector<8x128xf32>
    %567 = arith.select %564, %562, %566 : vector<8x128xi1>, vector<8x128xf32>
    %568 = arith.addf %545, %567 : vector<8x128xf32>
    %c40_267 = arith.constant 40 : index
    %c0_268 = arith.constant 0 : index
    %569 = vector.load %arg8[%c40_267, %c0_268] : memref<48x128xf32, #tpu.memory_space<vmem>>, vector<8x128xf32>
    tpu.vector_store %arg8[%c40_267, %c0_268], %568 {strides = array<i32>} : memref<48x128xf32, #tpu.memory_space<vmem>>, vector<8x128xf32>,
    %c40_269 = arith.constant 40 : index
    %c0_270 = arith.constant 0 : index
    %570 = vector.load %arg8[%c40_269, %c0_270] : memref<48x128xf32, #tpu.memory_space<vmem>>, vector<8x128xf32>
    %c0_271 = arith.constant 0 : index
    %c0_272 = arith.constant 0 : index
    %571 = vector.load %arg7[%c0_271, %c0_272] : memref<8x128xf32, #tpu.memory_space<vmem>>, vector<8x128xf32>
    tpu.vector_store %arg7[%c0_271, %c0_272], %570 {strides = array<i32>} : memref<8x128xf32, #tpu.memory_space<vmem>>, vector<8x128xf32>,
    return
  }
  func.func @transform_0(%arg0: i32, %arg1: memref<96xi32, #tpu.memory_space<smem>>) -> (i32, i32) {
    %c0_i32 = arith.constant 0 : i32
    %c0_i32_0 = arith.constant 0 : i32
    %c0_i32_1 = arith.constant 0 : i32
    return %c0_i32, %c0_i32_0 : i32, i32
  }
  func.func @transform_1(%arg0: i32, %arg1: memref<96xi32, #tpu.memory_space<smem>>) -> (i32, i32) {
    %c0_i32 = arith.constant 0 : i32
    %c0_i32_0 = arith.constant 0 : i32
    %c0_i32_1 = arith.constant 0 : i32
    return %c0_i32, %c0_i32_0 : i32, i32
  }
  func.func @transform_2(%arg0: i32, %arg1: memref<96xi32, #tpu.memory_space<smem>>) -> (i32, i32, i32) {
    %c0_i32 = arith.constant 0 : i32
    %c0_i32_0 = arith.constant 0 : i32
    %c0_i32_1 = arith.constant 0 : i32
    %c0_i32_2 = arith.constant 0 : i32
    return %c0_i32, %c0_i32_0, %c0_i32_1 : i32, i32, i32
  }
  func.func @transform_3(%arg0: i32, %arg1: memref<96xi32, #tpu.memory_space<smem>>) -> (i32, i32, i32) {
    %c0_i32 = arith.constant 0 : i32
    %c0_i32_0 = arith.constant 0 : i32
    %c0_i32_1 = arith.constant 0 : i32
    %c0_i32_2 = arith.constant 0 : i32
    return %c0_i32, %c0_i32_0, %c0_i32_1 : i32, i32, i32
  }
  func.func @transform_4(%arg0: i32, %arg1: memref<96xi32, #tpu.memory_space<smem>>) -> (i32, i32, i32) {
    %c0_i32 = arith.constant 0 : i32
    %c0_i32_0 = arith.constant 0 : i32
    %c0_i32_1 = arith.constant 0 : i32
    %c0_i32_2 = arith.constant 0 : i32
    return %c0_i32, %c0_i32_0, %c0_i32_1 : i32, i32, i32
  }
  func.func @transform_5(%arg0: i32, %arg1: memref<96xi32, #tpu.memory_space<smem>>) -> (i32, i32) {
    %c0_i32 = arith.constant 0 : i32
    %c0_i32_0 = arith.constant 0 : i32
    %c0_i32_1 = arith.constant 0 : i32
    return %c0_i32, %c0_i32_0 : i32, i32
  }
}

</mosaic_0001>

<llo_original>
// kernel: brep_face_encoder.1
$region0: #{brep_face_encoder.1}
  #allocation0 [shape = 'u32[]', space=smem, size = 0x4, offset = 0x4, fixed_abs, tag = 'smem constant byte address 0x4 - core index']
  #allocation1 [shape = 'u32[144,128]{1,0:T(1,128)}', space=vmem, size = 0x12000, scoped, tag = 'internal scratch']
  #allocation2 [shape = 'f32[48,128]{1,0:T(8,128)}', space=vmem, size = 0x6000, scoped, tag = 'scratch operand']
  #allocation3 [shape = 'f32[16,128]{1,0:T(8,128)}', space=vmem, size = 0x2000, scoped, tag = 'scratch operand']
  #allocation4 [shape = 's32[1]{0}', space=sflag, size = 0x4, scoped, tag = 'scoped memory for brep_face_encoder.1']
  #allocation5 [shape = 'u8[512]{0}', space=smem, size = 0x200, scoped, tag = 'prefetched SMEM operand 0']
  %s0 = inlined_call_operand.vmem [shape: s32[96], index: 0, kind: input, shape index: {}]
  %s1 = inlined_call_operand.vmem [shape: f32[48,128], index: 1, kind: input, shape index: {}]
  %s2 = inlined_call_operand.vmem [shape: f32[128,128], index: 2, kind: input, shape index: {}]
  %s3 = inlined_call_operand.vmem [shape: f32[3,128,128], index: 3, kind: input, shape index: {}]
  %s4 = inlined_call_operand.vmem [shape: f32[3,128,128], index: 4, kind: input, shape index: {}]
  %s5 = inlined_call_operand.vmem [shape: f32[3,1,128], index: 5, kind: input, shape index: {}]
  %s6 = inlined_call_operand.hbm [shape: f32[8,128], index: 6, kind: output, shape index: {}]
  %s7 = sld [smem:[#allocation0]]
  $region30: #{brep_face_encoder.1} parent=0
    _
  %s9 = ssub.s32 1, %s7
  %s10 = scalar_select 0, %s9, %s7
  %s11 = sshll.u32 %s0, 4
  %s12 = int_to_ptr.vmem [resolvable:$true] %s11
  %14 = dma.vmem_to_smem %s12, 16, [#allocation5], [#allocation4]
  %15 = dma.done [#allocation4], 16
  %16 = sfence
  $region1: #{brep_face_encoder.1} parent=0
    #allocation6 [shape = 'u8[4096]{0}', space=vmem, size = 0x1000, scoped, tag = 'output window, operand 0, single buffered']
    #allocation7 [shape = 's32[1]{0}', space=sflag, size = 0x4, scoped, tag = 'scoped memory for brep_face_encoder.1']
    %17 = vsyncpa [#allocation7], 0
    // Predicated region
    $region2: #{brep_face_encoder.1} parent=1 // pred_check
      _
    $region3: #{brep_face_encoder.1} parent=1 // pred_check_branch
      %19 = sbr.rel (0) target = $region5
    $region4: #{brep_face_encoder.1} parent=1 // pred_region
      _
    $region5: #{brep_face_encoder.1} parent=1 // pred_fallthru
      _
    // Predicated region
    $region6: #{brep_face_encoder.1} parent=1 // pred_check
      _
    $region7: #{brep_face_encoder.1} parent=1 // pred_check_branch
      %21 = sbr.rel (0) target = $region9
    $region8: #{brep_face_encoder.1} parent=1 // pred_region
      _
    $region9: #{brep_face_encoder.1} parent=1 // pred_fallthru
      _
    // Predicated region
    $region10: #{brep_face_encoder.1} parent=1 // pred_check
      _
    $region11: #{brep_face_encoder.1} parent=1 // pred_check_branch
      %23 = sbr.rel (0) target = $region13
    $region12: #{brep_face_encoder.1} parent=1 // pred_region
      _
    $region13: #{brep_face_encoder.1} parent=1 // pred_fallthru
      _
    // Predicated region
    $region14: #{brep_face_encoder.1} parent=1 // pred_check
      _
    $region15: #{brep_face_encoder.1} parent=1 // pred_check_branch
      %25 = sbr.rel (0) target = $region17
    $region16: #{brep_face_encoder.1} parent=1 // pred_region
      _
    $region17: #{brep_face_encoder.1} parent=1 // pred_fallthru
      _
    // Predicated region
    $region18: #{brep_face_encoder.1} parent=1 // pred_check
      _
    $region19: #{brep_face_encoder.1} parent=1 // pred_check_branch
      %27 = sbr.rel (0) target = $region21
    $region20: #{brep_face_encoder.1} parent=1 // pred_region
      _
    $region21: #{brep_face_encoder.1} parent=1 // pred_fallthru
      _
    %v28 = vld [vmem:[%s1] sm:$0xff]
    %v29 = vld [vmem:[%s1 + $0x8] sm:$0xff]
    %v30 = vld [vmem:[%s1 + $0x10] sm:$0xff]
    %v31 = vld [vmem:[%s1 + $0x18] sm:$0xff]
    %v32 = vld [vmem:[%s1 + $0x20] sm:$0xff]
    %v33 = vld [vmem:[%s1 + $0x28] sm:$0xff]
    %v34 = vld [vmem:[%s2] sm:$0xff]
    %v35 = vld [vmem:[%s2 + $0x8] sm:$0xff]
    %v36 = vld [vmem:[%s2 + $0x10] sm:$0xff]
    %v37 = vld [vmem:[%s2 + $0x18] sm:$0xff]
    %v38 = vld [vmem:[%s2 + $0x20] sm:$0xff]
    %v39 = vld [vmem:[%s2 + $0x28] sm:$0xff]
    %v40 = vld [vmem:[%s2 + $0x30] sm:$0xff]
    %v41 = vld [vmem:[%s2 + $0x38] sm:$0xff]
    %v42 = vld [vmem:[%s2 + $0x40] sm:$0xff]
    %v43 = vld [vmem:[%s2 + $0x48] sm:$0xff]
    %v44 = vld [vmem:[%s2 + $0x50] sm:$0xff]
    %v45 = vld [vmem:[%s2 + $0x58] sm:$0xff]
    %v46 = vld [vmem:[%s2 + $0x60] sm:$0xff]
    %v47 = vld [vmem:[%s2 + $0x68] sm:$0xff]
    %v48 = vld [vmem:[%s2 + $0x70] sm:$0xff]
    %v49 = vld [vmem:[%s2 + $0x78] sm:$0xff]
    %50 = vmatprep.subr.mxu0 0.0
    %51 = vmatpush1.msra.mxu0 %v34
    %52 = vmatprep.subr.mxu0 0.0
    %53 = vmatpush1.msra.mxu0 %v35
    %54 = vmatprep.subr.mxu0 0.0
    %55 = vmatpush1.msra.mxu0 %v36
    %56 = vmatprep.subr.mxu0 0.0
    %57 = vmatpush1.msra.mxu0 %v37
    %58 = vmatprep.subr.mxu0 0.0
    %59 = vmatpush1.msra.mxu0 %v38
    %60 = vmatprep.subr.mxu0 0.0
    %61 = vmatpush1.msra.mxu0 %v39
    %62 = vmatprep.subr.mxu0 0.0
    %63 = vmatpush1.msra.mxu0 %v40
    %64 = vmatprep.subr.mxu0 0.0
    %65 = vmatpush1.msra.mxu0 %v41
    %66 = vmatprep.subr.mxu0 0.0
    %67 = vmatpush1.msra.mxu0 %v42
    %68 = vmatprep.subr.mxu0 0.0
    %69 = vmatpush1.msra.mxu0 %v43
    %70 = vmatprep.subr.mxu0 0.0
    %71 = vmatpush1.msra.mxu0 %v44
    %72 = vmatprep.subr.mxu0 0.0
    %73 = vmatpush1.msra.mxu0 %v45
    %74 = vmatprep.subr.mxu0 0.0
    %75 = vmatpush1.msra.mxu0 %v46
    %76 = vmatprep.subr.mxu0 0.0
    %77 = vmatpush1.msra.mxu0 %v47
    %78 = vmatprep.subr.mxu0 0.0
    %79 = vmatpush1.msra.mxu0 %v48
    %80 = vmatprep.subr.mxu0 0.0
    %81 = vmatpush1.msra.mxu0 %v49
    %82 = vmatprep.subr.mxu0 0.0
    %83 = vmatpush1.msra.mxu0 0.0
    %84 = vmatprep.subr.mxu0 0.0
    %85 = vmatpush1.msra.mxu0 0.0
    %86 = vmatprep.subr.mxu0 0.0
    %87 = vmatpush1.msra.mxu0 0.0
    %88 = vmatprep.subr.mxu0 0.0
    %89 = vmatpush1.msra.mxu0 0.0
    %90 = vmatprep.subr.mxu0 0.0
    %91 = vmatpush1.msra.mxu0 0.0
    %92 = vmatprep.subr.mxu0 0.0
    %93 = vmatpush1.msra.mxu0 0.0
    %94 = vmatprep.subr.mxu0 0.0
    %95 = vmatpush1.msra.mxu0 0.0
    %96 = vmatprep.subr.mxu0 0.0
    %97 = vmatpush1.msra.mxu0 0.0
    %98 = vmatprep.subr.mxu0 0.0
    %99 = vmatpush1.msra.mxu0 0.0
    %100 = vmatprep.subr.mxu0 0.0
    %101 = vmatpush1.msra.mxu0 0.0
    %102 = vmatprep.subr.mxu0 0.0
    %103 = vmatpush1.msra.mxu0 0.0
    %104 = vmatprep.subr.mxu0 0.0
    %105 = vmatpush1.msra.mxu0 0.0
    %106 = vmatprep.subr.mxu0 0.0
    %107 = vmatpush1.msra.mxu0 0.0
    %108 = vmatprep.subr.mxu0 0.0
    %109 = vmatpush1.msra.mxu0 0.0
    %110 = vmatprep.subr.mxu0 0.0
    %111 = vmatpush1.msra.mxu0 0.0
    %112 = vmatprep.subr.mxu0 0.0
    %113 = vmatpush1.msra.mxu0 0.0
    %114 = vmatprep.mubr.f32.mxu0 0.0
    %115 = vmatmul.mubr.f32.gmra.mrb[0].mxu0 %v28
    %v116 = vpop.f32.mrb[0].mxu0
    %v117 = vadd.f32 0.0, %v116
    %v118 = vpop.f32.mrb[0].mxu0
    %119 = vmatprep.mubr.f32.mxu0 0.0
    %120 = vmatmul.mubr.f32.gmra.mrb[0].mxu0 %v29
    %v121 = vpop.f32.mrb[0].mxu0
    %v122 = vadd.f32 0.0, %v121
    %v123 = vpop.f32.mrb[0].mxu0
    %124 = vmatprep.mubr.f32.mxu0 0.0
    %125 = vmatmul.mubr.f32.gmra.mrb[0].mxu0 %v30
    %v126 = vpop.f32.mrb[0].mxu0
    %v127 = vadd.f32 0.0, %v126
    %v128 = vpop.f32.mrb[0].mxu0
    %129 = vmatprep.mubr.f32.mxu0 0.0
    %130 = vmatmul.mubr.f32.gmra.mrb[0].mxu0 %v31
    %v131 = vpop.f32.mrb[0].mxu0
    %v132 = vadd.f32 0.0, %v131
    %v133 = vpop.f32.mrb[0].mxu0
    %134 = vmatprep.mubr.f32.mxu0 0.0
    %135 = vmatmul.mubr.f32.gmra.mrb[0].mxu0 %v32
    %v136 = vpop.f32.mrb[0].mxu0
    %v137 = vadd.f32 0.0, %v136
    %v138 = vpop.f32.mrb[0].mxu0
    %139 = vmatprep.mubr.f32.mxu0 0.0
    %140 = vmatmul.mubr.f32.gmra.mrb[0].mxu0 %v33
    %v141 = vpop.f32.mrb[0].mxu0
    %v142 = vadd.f32 0.0, %v141
    %v143 = vpop.f32.mrb[0].mxu0
    %144 = vdwg.mxu0
    %vm145 = vcmp.gt.f32.partialorder %v117, 0.0
    %vm146 = vcmp.gt.f32.partialorder %v122, 0.0
    %vm147 = vcmp.gt.f32.partialorder %v127, 0.0
    %vm148 = vcmp.gt.f32.partialorder %v132, 0.0
    %vm149 = vcmp.gt.f32.partialorder %v137, 0.0
    %vm150 = vcmp.gt.f32.partialorder %v142, 0.0
    %v151 = vmul.f32 %v117, 0.01
    %v152 = vmul.f32 %v122, 0.01
    %v153 = vmul.f32 %v127, 0.01
    %v154 = vmul.f32 %v132, 0.01
    %v155 = vmul.f32 %v137, 0.01
    %v156 = vmul.f32 %v142, 0.01
    %v157 = vsel %vm145, %v117, %v151
    %v158 = vsel %vm146, %v122, %v152
    %v159 = vsel %vm147, %v127, %v153
    %v160 = vsel %vm148, %v132, %v154
    %v161 = vsel %vm149, %v137, %v155
    %v162 = vsel %vm150, %v142, %v156
    %163 = vst [vmem:[#allocation2] sm:$0xff] %v157
    %164 = vst [vmem:[#allocation2 + $0x8] sm:$0xff] %v158
    %165 = vst [vmem:[#allocation2 + $0x10] sm:$0xff] %v159
    %166 = vst [vmem:[#allocation2 + $0x18] sm:$0xff] %v160
    %167 = vst [vmem:[#allocation2 + $0x20] sm:$0xff] %v161
    %168 = vst [vmem:[#allocation2 + $0x28] sm:$0xff] %v162
    %169 = vst [vmem:[#allocation3] sm:$0xff] 3e+38
    %170 = vst [vmem:[#allocation3 + $0x8] sm:$0xff] 3e+38
    %s171 = sld [smem:[#allocation5]]
    %s172 = sld [smem:[#allocation5 + $0x14]]
    %s173 = scalar_lea.vmem [#allocation2], %s171
    %v174 = vld [vmem:[%s173] sm:$0x1]
    %s175 = scalar_lea.vmem [#allocation3], %s172
    %v176 = vld [vmem:[%s175] sm:$0x1]
    %v177 = vmin.f32 %v176, %v174
    %178 = vst [vmem:[%s175] sm:$0x1] %v177
    %s179 = sld [smem:[#allocation5 + $0x1]]
    %s180 = sld [smem:[#allocation5 + $0x15]]
    %s181 = scalar_lea.vmem [#allocation2], %s179
    %v182 = vld [vmem:[%s181] sm:$0x1]
    %s183 = scalar_lea.vmem [#allocation3], %s180
    %v184 = vld [vmem:[%s183] sm:$0x1]
    %v185 = vmin.f32 %v184, %v182
    %186 = vst [vmem:[%s183] sm:$0x1] %v185
    %s187 = sld [smem:[#allocation5 + $0x2]]
    %s188 = sld [smem:[#allocation5 + $0x16]]
    %s189 = scalar_lea.vmem [#allocation2], %s187
    %v190 = vld [vmem:[%s189] sm:$0x1]
    %s191 = scalar_lea.vmem [#allocation3], %s188
    %v192 = vld [vmem:[%s191] sm:$0x1]
    %v193 = vmin.f32 %v192, %v190
    %194 = vst [vmem:[%s191] sm:$0x1] %v193
    %s195 = sld [smem:[#allocation5 + $0x3]]
    %s196 = sld [smem:[#allocation5 + $0x17]]
    %s197 = scalar_lea.vmem [#allocation2], %s195
    %v198 = vld [vmem:[%s197] sm:$0x1]
    %s199 = scalar_lea.vmem [#allocation3], %s196
    %v200 = vld [vmem:[%s199] sm:$0x1]
    %v201 = vmin.f32 %v200, %v198
    %202 = vst [vmem:[%s199] sm:$0x1] %v201
    %s203 = sld [smem:[#allocation5 + $0x4]]
    %s204 = sld [smem:[#allocation5 + $0x18]]
    %s205 = scalar_lea.vmem [#allocation2], %s203
    %v206 = vld [vmem:[%s205] sm:$0x1]
    %s207 = scalar_lea.vmem [#allocation3], %s204
    %v208 = vld [vmem:[%s207] sm:$0x1]
    %v209 = vmin.f32 %v208, %v206
    %210 = vst [vmem:[%s207] sm:$0x1] %v209
    %s211 = sld [smem:[#allocation5 + $0x5]]
    %s212 = sld [smem:[#allocation5 + $0x19]]
    %s213 = scalar_lea.vmem [#allocation2], %s211
    %v214 = vld [vmem:[%s213] sm:$0x1]
    %s215 = scalar_lea.vmem [#allocation3], %s212
    %v216 = vld [vmem:[%s215] sm:$0x1]
    %v217 = vmin.f32 %v216, %v214
    %218 = vst [vmem:[%s215] sm:$0x1] %v217
    %s219 = sld [smem:[#allocation5 + $0x6]]
    %s220 = sld [smem:[#allocation5 + $0x1a]]
    %s221 = scalar_lea.vmem [#allocation2], %s219
    %v222 = vld [vmem:[%s221] sm:$0x1]
    %s223 = scalar_lea.vmem [#allocation3], %s220
    %v224 = vld [vmem:[%s223] sm:$0x1]
    %v225 = vmin.f32 %v224, %v222
    %226 = vst [vmem:[%s223] sm:$0x1] %v225
    %s227 = sld [smem:[#allocation5 + $0x7]]
    %s228 = sld [smem:[#allocation5 + $0x1b]]
    %s229 = scalar_lea.vmem [#allocation2], %s227
    %v230 = vld [vmem:[%s229] sm:$0x1]
    %s231 = scalar_lea.vmem [#allocation3], %s228
    %v232 = vld [vmem:[%s231] sm:$0x1]
    %v233 = vmin.f32 %v232, %v230
    %234 = vst [vmem:[%s231] sm:$0x1] %v233
    %s235 = sld [smem:[#allocation5 + $0x8]]
    %s236 = sld [smem:[#allocation5 + $0x1c]]
    %s237 = scalar_lea.vmem [#allocation2], %s235
    %v238 = vld [vmem:[%s237] sm:$0x1]
    %s239 = scalar_lea.vmem [#allocation3], %s236
    %v240 = vld [vmem:[%s239] sm:$0x1]
    %v241 = vmin.f32 %v240, %v238
    %242 = vst [vmem:[%s239] sm:$0x1] %v241
    %s243 = sld [smem:[#allocation5 + $0x9]]
    %s244 = sld [smem:[#allocation5 + $0x1d]]
    %s245 = scalar_lea.vmem [#allocation2], %s243
    %v246 = vld [vmem:[%s245] sm:$0x1]
    %s247 = scalar_lea.vmem [#allocation3], %s244
    %v248 = vld [vmem:[%s247] sm:$0x1]
    %v249 = vmin.f32 %v248, %v246
    %250 = vst [vmem:[%s247] sm:$0x1] %v249
    %s251 = sld [smem:[#allocation5 + $0xa]]
    %s252 = sld [smem:[#allocation5 + $0x1e]]
    %s253 = scalar_lea.vmem [#allocation2], %s251
    %v254 = vld [vmem:[%s253] sm:$0x1]
    %s255 = scalar_lea.vmem [#allocation3], %s252
    %v256 = vld [vmem:[%s255] sm:$0x1]
    %v257 = vmin.f32 %v256, %v254
    %258 = vst [vmem:[%s255] sm:$0x1] %v257
    %s259 = sld [smem:[#allocation5 + $0xb]]
    %s260 = sld [smem:[#allocation5 + $0x1f]]
    %s261 = scalar_lea.vmem [#allocation2], %s259
    %v262 = vld [vmem:[%s261] sm:$0x1]
    %s263 = scalar_lea.vmem [#allocation3], %s260
    %v264 = vld [vmem:[%s263] sm:$0x1]
    %v265 = vmin.f32 %v264, %v262
    %266 = vst [vmem:[%s263] sm:$0x1] %v265
    %s267 = sld [smem:[#allocation5 + $0xc]]
    %s268 = sld [smem:[#allocation5 + $0x20]]
    %s269 = scalar_lea.vmem [#allocation2], %s267
    %v270 = vld [vmem:[%s269] sm:$0x1]
    %s271 = scalar_lea.vmem [#allocation3], %s268
    %v272 = vld [vmem:[%s271] sm:$0x1]
    %v273 = vmin.f32 %v272, %v270
    %274 = vst [vmem:[%s271] sm:$0x1] %v273
    %s275 = sld [smem:[#allocation5 + $0xd]]
    %s276 = sld [smem:[#allocation5 + $0x21]]
    %s277 = scalar_lea.vmem [#allocation2], %s275
    %v278 = vld [vmem:[%s277] sm:$0x1]
    %s279 = scalar_lea.vmem [#allocation3], %s276
    %v280 = vld [vmem:[%s279] sm:$0x1]
    %v281 = vmin.f32 %v280, %v278
    %282 = vst [vmem:[%s279] sm:$0x1] %v281
    %s283 = sld [smem:[#allocation5 + $0xe]]
    %s284 = sld [smem:[#allocation5 + $0x22]]
    %s285 = scalar_lea.vmem [#allocation2], %s283
    %v286 = vld [vmem:[%s285] sm:$0x1]
    %s287 = scalar_lea.vmem [#allocation3], %s284
    %v288 = vld [vmem:[%s287] sm:$0x1]
    %v289 = vmin.f32 %v288, %v286
    %290 = vst [vmem:[%s287] sm:$0x1] %v289
    %s291 = sld [smem:[#allocation5 + $0xf]]
    %s292 = sld [smem:[#allocation5 + $0x23]]
    %s293 = scalar_lea.vmem [#allocation2], %s291
    %v294 = vld [vmem:[%s293] sm:$0x1]
    %s295 = scalar_lea.vmem [#allocation3], %s292
    %v296 = vld [vmem:[%s295] sm:$0x1]
    %v297 = vmin.f32 %v296, %v294
    %298 = vst [vmem:[%s295] sm:$0x1] %v297
    %s299 = sld [smem:[#allocation5 + $0x10]]
    %s300 = sld [smem:[#allocation5 + $0x24]]
    %s301 = scalar_lea.vmem [#allocation2], %s299
    %v302 = vld [vmem:[%s301] sm:$0x1]
    %s303 = scalar_lea.vmem [#allocation3], %s300
    %v304 = vld [vmem:[%s303] sm:$0x1]
    %v305 = vmin.f32 %v304, %v302
    %306 = vst [vmem:[%s303] sm:$0x1] %v305
    %s307 = sld [smem:[#allocation5 + $0x11]]
    %s308 = sld [smem:[#allocation5 + $0x25]]
    %s309 = scalar_lea.vmem [#allocation2], %s307
    %v310 = vld [vmem:[%s309] sm:$0x1]
    %s311 = scalar_lea.vmem [#allocation3], %s308
    %v312 = vld [vmem:[%s311] sm:$0x1]
    %v313 = vmin.f32 %v312, %v310
    %314 = vst [vmem:[%s311] sm:$0x1] %v313
    %s315 = sld [smem:[#allocation5 + $0x12]]
    %s316 = sld [smem:[#allocation5 + $0x26]]
    %s317 = scalar_lea.vmem [#allocation2], %s315
    %v318 = vld [vmem:[%s317] sm:$0x1]
    %s319 = scalar_lea.vmem [#allocation3], %s316
    %v320 = vld [vmem:[%s319] sm:$0x1]
    %v321 = vmin.f32 %v320, %v318
    %322 = vst [vmem:[%s319] sm:$0x1] %v321
    %s323 = sld [smem:[#allocation5 + $0x13]]
    %s324 = sld [smem:[#allocation5 + $0x27]]
    %s325 = scalar_lea.vmem [#allocation2], %s323
    %v326 = vld [vmem:[%s325] sm:$0x1]
    %s327 = scalar_lea.vmem [#allocation3], %s324
    %v328 = vld [vmem:[%s327] sm:$0x1]
    %v329 = vmin.f32 %v328, %v326
    %330 = vst [vmem:[%s327] sm:$0x1] %v329
    %v331 = vld [vmem:[#allocation2 + $0x10] sm:$0xff]
    %v332 = vld [vmem:[#allocation2 + $0x18] sm:$0xff]
    %v333 = vld [vmem:[#allocation3] sm:$0xff]
    %v334 = vld [vmem:[#allocation3 + $0x8] sm:$0xff]
    %vm335 = vcmp.lt.f32.partialorder %v333, 1e+38
    %vm336 = vcmp.lt.f32.partialorder %v334, 1e+38
    %v337 = vsub.f32 %v331, %v333
    %v338 = vsub.f32 %v332, %v334
    %v339 = vsel %vm335, %v337, 0.0
    %v340 = vsel %vm336, %v338, 0.0
    %v341 = vld [vmem:[%s3] sm:$0xff]
    %v342 = vld [vmem:[%s3 + $0x8] sm:$0xff]
    %v343 = vld [vmem:[%s3 + $0x10] sm:$0xff]
    %v344 = vld [vmem:[%s3 + $0x18] sm:$0xff]
    %v345 = vld [vmem:[%s3 + $0x20] sm:$0xff]
    %v346 = vld [vmem:[%s3 + $0x28] sm:$0xff]
    %v347 = vld [vmem:[%s3 + $0x30] sm:$0xff]
    %v348 = vld [vmem:[%s3 + $0x38] sm:$0xff]
    %v349 = vld [vmem:[%s3 + $0x40] sm:$0xff]
    %v350 = vld [vmem:[%s3 + $0x48] sm:$0xff]
    %v351 = vld [vmem:[%s3 + $0x50] sm:$0xff]
    %v352 = vld [vmem:[%s3 + $0x58] sm:$0xff]
    %v353 = vld [vmem:[%s3 + $0x60] sm:$0xff]
    %v354 = vld [vmem:[%s3 + $0x68] sm:$0xff]
    %v355 = vld [vmem:[%s3 + $0x70] sm:$0xff]
    %v356 = vld [vmem:[%s3 + $0x78] sm:$0xff]
    %v357 = vld [vmem:[%s4] sm:$0xff]
    %v358 = vld [vmem:[%s4 + $0x8] sm:$0xff]
    %v359 = vld [vmem:[%s4 + $0x10] sm:$0xff]
    %v360 = vld [vmem:[%s4 + $0x18] sm:$0xff]
    %v361 = vld [vmem:[%s4 + $0x20] sm:$0xff]
    %v362 = vld [vmem:[%s4 + $0x28] sm:$0xff]
    %v363 = vld [vmem:[%s4 + $0x30] sm:$0xff]
    %v364 = vld [vmem:[%s4 + $0x38] sm:$0xff]
    %v365 = vld [vmem:[%s4 + $0x40] sm:$0xff]
    %v366 = vld [vmem:[%s4 + $0x48] sm:$0xff]
    %v367 = vld [vmem:[%s4 + $0x50] sm:$0xff]
    %v368 = vld [vmem:[%s4 + $0x58] sm:$0xff]
    %v369 = vld [vmem:[%s4 + $0x60] sm:$0xff]
    %v370 = vld [vmem:[%s4 + $0x68] sm:$0xff]
    %v371 = vld [vmem:[%s4 + $0x70] sm:$0xff]
    %v372 = vld [vmem:[%s4 + $0x78] sm:$0xff]
    %373 = vmatprep.subr.mxu0 0.0
    %374 = vmatpush1.msra.mxu0 %v357
    %375 = vmatprep.subr.mxu0 0.0
    %376 = vmatpush1.msra.mxu0 %v358
    %377 = vmatprep.subr.mxu0 0.0
    %378 = vmatpush1.msra.mxu0 %v359
    %379 = vmatprep.subr.mxu0 0.0
    %380 = vmatpush1.msra.mxu0 %v360
    %381 = vmatprep.subr.mxu0 0.0
    %382 = vmatpush1.msra.mxu0 %v361
    %383 = vmatprep.subr.mxu0 0.0
    %384 = vmatpush1.msra.mxu0 %v362
    %385 = vmatprep.subr.mxu0 0.0
    %386 = vmatpush1.msra.mxu0 %v363
    %387 = vmatprep.subr.mxu0 0.0
    %388 = vmatpush1.msra.mxu0 %v364
    %389 = vmatprep.subr.mxu0 0.0
    %390 = vmatpush1.msra.mxu0 %v365
    %391 = vmatprep.subr.mxu0 0.0
    %392 = vmatpush1.msra.mxu0 %v366
    %393 = vmatprep.subr.mxu0 0.0
    %394 = vmatpush1.msra.mxu0 %v367
    %395 = vmatprep.subr.mxu0 0.0
    %396 = vmatpush1.msra.mxu0 %v368
    %397 = vmatprep.subr.mxu0 0.0
    %398 = vmatpush1.msra.mxu0 %v369
    %399 = vmatprep.subr.mxu0 0.0
    %400 = vmatpush1.msra.mxu0 %v370
    %401 = vmatprep.subr.mxu0 0.0
    %402 = vmatpush1.msra.mxu0 %v371
    %403 = vmatprep.subr.mxu0 0.0
    %404 = vmatpush1.msra.mxu0 %v372
    %405 = vmatprep.subr.mxu0 0.0
    %406 = vmatpush1.msra.mxu0 0.0
    %407 = vmatprep.subr.mxu0 0.0
    %408 = vmatpush1.msra.mxu0 0.0
    %409 = vmatprep.subr.mxu0 0.0
    %410 = vmatpush1.msra.mxu0 0.0
    %411 = vmatprep.subr.mxu0 0.0
    %412 = vmatpush1.msra.mxu0 0.0
    %413 = vmatprep.subr.mxu0 0.0
    %414 = vmatpush1.msra.mxu0 0.0
    %415 = vmatprep.subr.mxu0 0.0
    %416 = vmatpush1.msra.mxu0 0.0
    %417 = vmatprep.subr.mxu0 0.0
    %418 = vmatpush1.msra.mxu0 0.0
    %419 = vmatprep.subr.mxu0 0.0
    %420 = vmatpush1.msra.mxu0 0.0
    %421 = vmatprep.subr.mxu0 0.0
    %422 = vmatpush1.msra.mxu0 0.0
    %423 = vmatprep.subr.mxu0 0.0
    %424 = vmatpush1.msra.mxu0 0.0
    %425 = vmatprep.subr.mxu0 0.0
    %426 = vmatpush1.msra.mxu0 0.0
    %427 = vmatprep.subr.mxu0 0.0
    %428 = vmatpush1.msra.mxu0 0.0
    %429 = vmatprep.subr.mxu0 0.0
    %430 = vmatpush1.msra.mxu0 0.0
    %431 = vmatprep.subr.mxu0 0.0
    %432 = vmatpush1.msra.mxu0 0.0
    %433 = vmatprep.subr.mxu0 0.0
    %434 = vmatpush1.msra.mxu0 0.0
    %435 = vmatprep.subr.mxu0 0.0
    %436 = vmatpush1.msra.mxu0 0.0
    %437 = vmatprep.mubr.f32.mxu0 0.0
    %438 = vmatmul.mubr.f32.gmra.mrb[0].mxu0 %v339
    %v439 = vpop.f32.mrb[0].mxu0
    %v440 = vadd.f32 0.0, %v439
    %v441 = vpop.f32.mrb[0].mxu0
    %442 = vmatprep.mubr.f32.mxu0 0.0
    %443 = vmatmul.mubr.f32.gmra.mrb[0].mxu0 %v340
    %v444 = vpop.f32.mrb[0].mxu0
    %v445 = vadd.f32 0.0, %v444
    %v446 = vpop.f32.mrb[0].mxu0
    %447 = vdwg.mxu0
    %448 = vmatprep.subr.mxu0 0.0
    %449 = vmatpush1.msra.mxu0 %v341
    %450 = vmatprep.subr.mxu0 0.0
    %451 = vmatpush1.msra.mxu0 %v342
    %452 = vmatprep.subr.mxu0 0.0
    %453 = vmatpush1.msra.mxu0 %v343
    %454 = vmatprep.subr.mxu0 0.0
    %455 = vmatpush1.msra.mxu0 %v344
    %456 = vmatprep.subr.mxu0 0.0
    %457 = vmatpush1.msra.mxu0 %v345
    %458 = vmatprep.subr.mxu0 0.0
    %459 = vmatpush1.msra.mxu0 %v346
    %460 = vmatprep.subr.mxu0 0.0
    %461 = vmatpush1.msra.mxu0 %v347
    %462 = vmatprep.subr.mxu0 0.0
    %463 = vmatpush1.msra.mxu0 %v348
    %464 = vmatprep.subr.mxu0 0.0
    %465 = vmatpush1.msra.mxu0 %v349
    %466 = vmatprep.subr.mxu0 0.0
    %467 = vmatpush1.msra.mxu0 %v350
    %468 = vmatprep.subr.mxu0 0.0
    %469 = vmatpush1.msra.mxu0 %v351
    %470 = vmatprep.subr.mxu0 0.0
    %471 = vmatpush1.msra.mxu0 %v352
    %472 = vmatprep.subr.mxu0 0.0
    %473 = vmatpush1.msra.mxu0 %v353
    %474 = vmatprep.subr.mxu0 0.0
    %475 = vmatpush1.msra.mxu0 %v354
    %476 = vmatprep.subr.mxu0 0.0
    %477 = vmatpush1.msra.mxu0 %v355
    %478 = vmatprep.subr.mxu0 0.0
    %479 = vmatpush1.msra.mxu0 %v356
    %480 = vmatprep.subr.mxu0 0.0
    %481 = vmatpush1.msra.mxu0 0.0
    %482 = vmatprep.subr.mxu0 0.0
    %483 = vmatpush1.msra.mxu0 0.0
    %484 = vmatprep.subr.mxu0 0.0
    %485 = vmatpush1.msra.mxu0 0.0
    %486 = vmatprep.subr.mxu0 0.0
    %487 = vmatpush1.msra.mxu0 0.0
    %488 = vmatprep.subr.mxu0 0.0
    %489 = vmatpush1.msra.mxu0 0.0
    %490 = vmatprep.subr.mxu0 0.0
    %491 = vmatpush1.msra.mxu0 0.0
    %492 = vmatprep.subr.mxu0 0.0
    %493 = vmatpush1.msra.mxu0 0.0
    %494 = vmatprep.subr.mxu0 0.0
    %495 = vmatpush1.msra.mxu0 0.0
    %496 = vmatprep.subr.mxu0 0.0
    %497 = vmatpush1.msra.mxu0 0.0
    %498 = vmatprep.subr.mxu0 0.0
    %499 = vmatpush1.msra.mxu0 0.0
    %500 = vmatprep.subr.mxu0 0.0
    %501 = vmatpush1.msra.mxu0 0.0
    %502 = vmatprep.subr.mxu0 0.0
    %503 = vmatpush1.msra.mxu0 0.0
    %504 = vmatprep.subr.mxu0 0.0
    %505 = vmatpush1.msra.mxu0 0.0
    %506 = vmatprep.subr.mxu0 0.0
    %507 = vmatpush1.msra.mxu0 0.0
    %508 = vmatprep.subr.mxu0 0.0
    %509 = vmatpush1.msra.mxu0 0.0
    %510 = vmatprep.subr.mxu0 0.0
    %511 = vmatpush1.msra.mxu0 0.0
    %512 = vmatprep.mubr.f32.mxu0 0.0
    %513 = vmatmul.mubr.f32.gmra.mrb[0].mxu0 %v331
    %v514 = vpop.f32.mrb[0].mxu0
    %v515 = vadd.f32 %v440, %v514
    %v516 = vpop.f32.mrb[0].mxu0
    %517 = vmatprep.mubr.f32.mxu0 0.0
    %518 = vmatmul.mubr.f32.gmra.mrb[0].mxu0 %v332
    %v519 = vpop.f32.mrb[0].mxu0
    %v520 = vadd.f32 %v445, %v519
    %v521 = vpop.f32.mrb[0].mxu0
    %522 = vdwg.mxu0
    %v523 = vld [vmem:[%s5] sm:$0x1]
    %v525 = vlaneseq
    %v526 = vshrl.u32 %v525, 7
    %v527 = vsub.s32 0, %v526
    %v528 = vrot.slane %v523, %v527
    %v530 = vadd.f32 %v515, %v528
    %v531 = vadd.f32 %v520, %v528
    %vm532 = vcmp.gt.f32.partialorder %v530, 0.0
    %vm533 = vcmp.gt.f32.partialorder %v531, 0.0
    %v534 = vmul.f32 %v530, 0.01
    %v535 = vmul.f32 %v531, 0.01
    %v536 = vsel %vm532, %v530, %v534
    %v537 = vsel %vm533, %v531, %v535
    %v538 = vadd.f32 %v331, %v536
    %v539 = vadd.f32 %v332, %v537
    %540 = vst [vmem:[#allocation2 + $0x10] sm:$0xff] %v538
    %541 = vst [vmem:[#allocation2 + $0x18] sm:$0xff] %v539
    %542 = vst [vmem:[#allocation3] sm:$0xff] 3e+38
    %s543 = sld [smem:[#allocation5 + $0x28]]
    %s544 = sld [smem:[#allocation5 + $0x38]]
    %s545 = sadd.s32 %s543, 16
    %s546 = scalar_lea.vmem [#allocation2], %s545
    %v547 = vld [vmem:[%s546] sm:$0x1]
    %s548 = scalar_lea.vmem [#allocation3], %s544
    %v549 = vld [vmem:[%s548] sm:$0x1]
    %v550 = vmin.f32 %v549, %v547
    %551 = vst [vmem:[%s548] sm:$0x1] %v550
    %s552 = sld [smem:[#allocation5 + $0x29]]
    %s553 = sld [smem:[#allocation5 + $0x39]]
    %s554 = sadd.s32 %s552, 16
    %s555 = scalar_lea.vmem [#allocation2], %s554
    %v556 = vld [vmem:[%s555] sm:$0x1]
    %s557 = scalar_lea.vmem [#allocation3], %s553
    %v558 = vld [vmem:[%s557] sm:$0x1]
    %v559 = vmin.f32 %v558, %v556
    %560 = vst [vmem:[%s557] sm:$0x1] %v559
    %s561 = sld [smem:[#allocation5 + $0x2a]]
    %s562 = sld [smem:[#allocation5 + $0x3a]]
    %s563 = sadd.s32 %s561, 16
    %s564 = scalar_lea.vmem [#allocation2], %s563
    %v565 = vld [vmem:[%s564] sm:$0x1]
    %s566 = scalar_lea.vmem [#allocation3], %s562
    %v567 = vld [vmem:[%s566] sm:$0x1]
    %v568 = vmin.f32 %v567, %v565
    %569 = vst [vmem:[%s566] sm:$0x1] %v568
    %s570 = sld [smem:[#allocation5 + $0x2b]]
    %s571 = sld [smem:[#allocation5 + $0x3b]]
    %s572 = sadd.s32 %s570, 16
    %s573 = scalar_lea.vmem [#allocation2], %s572
    %v574 = vld [vmem:[%s573] sm:$0x1]
    %s575 = scalar_lea.vmem [#allocation3], %s571
    %v576 = vld [vmem:[%s575] sm:$0x1]
    %v577 = vmin.f32 %v576, %v574
    %578 = vst [vmem:[%s575] sm:$0x1] %v577
    %s579 = sld [smem:[#allocation5 + $0x2c]]
    %s580 = sld [smem:[#allocation5 + $0x3c]]
    %s581 = sadd.s32 %s579, 16
    %s582 = scalar_lea.vmem [#allocation2], %s581
    %v583 = vld [vmem:[%s582] sm:$0x1]
    %s584 = scalar_lea.vmem [#allocation3], %s580
    %v585 = vld [vmem:[%s584] sm:$0x1]
    %v586 = vmin.f32 %v585, %v583
    %587 = vst [vmem:[%s584] sm:$0x1] %v586
    %s588 = sld [smem:[#allocation5 + $0x2d]]
    %s589 = sld [smem:[#allocation5 + $0x3d]]
    %s590 = sadd.s32 %s588, 16
    %s591 = scalar_lea.vmem [#allocation2], %s590
    %v592 = vld [vmem:[%s591] sm:$0x1]
    %s593 = scalar_lea.vmem [#allocation3], %s589
    %v594 = vld [vmem:[%s593] sm:$0x1]
    %v595 = vmin.f32 %v594, %v592
    %596 = vst [vmem:[%s593] sm:$0x1] %v595
    %s597 = sld [smem:[#allocation5 + $0x2e]]
    %s598 = sld [smem:[#allocation5 + $0x3e]]
    %s599 = sadd.s32 %s597, 16
    %s600 = scalar_lea.vmem [#allocation2], %s599
    %v601 = vld [vmem:[%s600] sm:$0x1]
    %s602 = scalar_lea.vmem [#allocation3], %s598
    %v603 = vld [vmem:[%s602] sm:$0x1]
    %v604 = vmin.f32 %v603, %v601
    %605 = vst [vmem:[%s602] sm:$0x1] %v604
    %s606 = sld [smem:[#allocation5 + $0x2f]]
    %s607 = sld [smem:[#allocation5 + $0x3f]]
    %s608 = sadd.s32 %s606, 16
    %s609 = scalar_lea.vmem [#allocation2], %s608
    %v610 = vld [vmem:[%s609] sm:$0x1]
    %s611 = scalar_lea.vmem [#allocation3], %s607
    %v612 = vld [vmem:[%s611] sm:$0x1]
    %v613 = vmin.f32 %v612, %v610
    %614 = vst [vmem:[%s611] sm:$0x1] %v613
    %s615 = sld [smem:[#allocation5 + $0x30]]
    %s616 = sld [smem:[#allocation5 + $0x40]]
    %s617 = sadd.s32 %s615, 16
    %s618 = scalar_lea.vmem [#allocation2], %s617
    %v619 = vld [vmem:[%s618] sm:$0x1]
    %s620 = scalar_lea.vmem [#allocation3], %s616
    %v621 = vld [vmem:[%s620] sm:$0x1]
    %v622 = vmin.f32 %v621, %v619
    %623 = vst [vmem:[%s620] sm:$0x1] %v622
    %s624 = sld [smem:[#allocation5 + $0x31]]
    %s625 = sld [smem:[#allocation5 + $0x41]]
    %s626 = sadd.s32 %s624, 16
    %s627 = scalar_lea.vmem [#allocation2], %s626
    %v628 = vld [vmem:[%s627] sm:$0x1]
    %s629 = scalar_lea.vmem [#allocation3], %s625
    %v630 = vld [vmem:[%s629] sm:$0x1]
    %v631 = vmin.f32 %v630, %v628
    %632 = vst [vmem:[%s629] sm:$0x1] %v631
    %s633 = sld [smem:[#allocation5 + $0x32]]
    %s634 = sld [smem:[#allocation5 + $0x42]]
    %s635 = sadd.s32 %s633, 16
    %s636 = scalar_lea.vmem [#allocation2], %s635
    %v637 = vld [vmem:[%s636] sm:$0x1]
    %s638 = scalar_lea.vmem [#allocation3], %s634
    %v639 = vld [vmem:[%s638] sm:$0x1]
    %v640 = vmin.f32 %v639, %v637
    %641 = vst [vmem:[%s638] sm:$0x1] %v640
    %s642 = sld [smem:[#allocation5 + $0x33]]
    %s643 = sld [smem:[#allocation5 + $0x43]]
    %s644 = sadd.s32 %s642, 16
    %s645 = scalar_lea.vmem [#allocation2], %s644
    %v646 = vld [vmem:[%s645] sm:$0x1]
    %s647 = scalar_lea.vmem [#allocation3], %s643
    %v648 = vld [vmem:[%s647] sm:$0x1]
    %v649 = vmin.f32 %v648, %v646
    %650 = vst [vmem:[%s647] sm:$0x1] %v649
    %s651 = sld [smem:[#allocation5 + $0x34]]
    %s652 = sld [smem:[#allocation5 + $0x44]]
    %s653 = sadd.s32 %s651, 16
    %s654 = scalar_lea.vmem [#allocation2], %s653
    %v655 = vld [vmem:[%s654] sm:$0x1]
    %s656 = scalar_lea.vmem [#allocation3], %s652
    %v657 = vld [vmem:[%s656] sm:$0x1]
    %v658 = vmin.f32 %v657, %v655
    %659 = vst [vmem:[%s656] sm:$0x1] %v658
    %s660 = sld [smem:[#allocation5 + $0x35]]
    %s661 = sld [smem:[#allocation5 + $0x45]]
    %s662 = sadd.s32 %s660, 16
    %s663 = scalar_lea.vmem [#allocation2], %s662
    %v664 = vld [vmem:[%s663] sm:$0x1]
    %s665 = scalar_lea.vmem [#allocation3], %s661
    %v666 = vld [vmem:[%s665] sm:$0x1]
    %v667 = vmin.f32 %v666, %v664
    %668 = vst [vmem:[%s665] sm:$0x1] %v667
    %s669 = sld [smem:[#allocation5 + $0x36]]
    %s670 = sld [smem:[#allocation5 + $0x46]]
    %s671 = sadd.s32 %s669, 16
    %s672 = scalar_lea.vmem [#allocation2], %s671
    %v673 = vld [vmem:[%s672] sm:$0x1]
    %s674 = scalar_lea.vmem [#allocation3], %s670
    %v675 = vld [vmem:[%s674] sm:$0x1]
    %v676 = vmin.f32 %v675, %v673
    %677 = vst [vmem:[%s674] sm:$0x1] %v676
    %s678 = sld [smem:[#allocation5 + $0x37]]
    %s679 = sld [smem:[#allocation5 + $0x47]]
    %s680 = sadd.s32 %s678, 16
    %s681 = scalar_lea.vmem [#allocation2], %s680
    %v682 = vld [vmem:[%s681] sm:$0x1]
    %s683 = scalar_lea.vmem [#allocation3], %s679
    %v684 = vld [vmem:[%s683] sm:$0x1]
    %v685 = vmin.f32 %v684, %v682
    %686 = vst [vmem:[%s683] sm:$0x1] %v685
    %v687 = vld [vmem:[#allocation2 + $0x20] sm:$0xff]
    %v688 = vld [vmem:[#allocation3] sm:$0xff]
    %vm689 = vcmp.lt.f32.partialorder %v688, 1e+38
    %v690 = vsub.f32 %v687, %v688
    %v691 = vsel %vm689, %v690, 0.0
    %s692 = scalar_lea.vmem %s3, 128
    %v693 = vld [vmem:[%s692] sm:$0xff]
    %v694 = vld [vmem:[%s692 + $0x8] sm:$0xff]
    %v695 = vld [vmem:[%s692 + $0x10] sm:$0xff]
    %v696 = vld [vmem:[%s692 + $0x18] sm:$0xff]
    %v697 = vld [vmem:[%s692 + $0x20] sm:$0xff]
    %v698 = vld [vmem:[%s692 + $0x28] sm:$0xff]
    %v699 = vld [vmem:[%s692 + $0x30] sm:$0xff]
    %v700 = vld [vmem:[%s692 + $0x38] sm:$0xff]
    %v701 = vld [vmem:[%s692 + $0x40] sm:$0xff]
    %v702 = vld [vmem:[%s692 + $0x48] sm:$0xff]
    %v703 = vld [vmem:[%s692 + $0x50] sm:$0xff]
    %v704 = vld [vmem:[%s692 + $0x58] sm:$0xff]
    %v705 = vld [vmem:[%s692 + $0x60] sm:$0xff]
    %v706 = vld [vmem:[%s692 + $0x68] sm:$0xff]
    %v707 = vld [vmem:[%s692 + $0x70] sm:$0xff]
    %v708 = vld [vmem:[%s692 + $0x78] sm:$0xff]
    %s709 = scalar_lea.vmem %s4, 128
    %v710 = vld [vmem:[%s709] sm:$0xff]
    %v711 = vld [vmem:[%s709 + $0x8] sm:$0xff]
    %v712 = vld [vmem:[%s709 + $0x10] sm:$0xff]
    %v713 = vld [vmem:[%s709 + $0x18] sm:$0xff]
    %v714 = vld [vmem:[%s709 + $0x20] sm:$0xff]
    %v715 = vld [vmem:[%s709 + $0x28] sm:$0xff]
    %v716 = vld [vmem:[%s709 + $0x30] sm:$0xff]
    %v717 = vld [vmem:[%s709 + $0x38] sm:$0xff]
    %v718 = vld [vmem:[%s709 + $0x40] sm:$0xff]
    %v719 = vld [vmem:[%s709 + $0x48] sm:$0xff]
    %v720 = vld [vmem:[%s709 + $0x50] sm:$0xff]
    %v721 = vld [vmem:[%s709 + $0x58] sm:$0xff]
    %v722 = vld [vmem:[%s709 + $0x60] sm:$0xff]
    %v723 = vld [vmem:[%s709 + $0x68] sm:$0xff]
    %v724 = vld [vmem:[%s709 + $0x70] sm:$0xff]
    %v725 = vld [vmem:[%s709 + $0x78] sm:$0xff]
    %726 = vmatprep.subr.mxu0 0.0
    %727 = vmatpush1.msra.mxu0 %v710
    %728 = vmatprep.subr.mxu0 0.0
    %729 = vmatpush1.msra.mxu0 %v711
    %730 = vmatprep.subr.mxu0 0.0
    %731 = vmatpush1.msra.mxu0 %v712
    %732 = vmatprep.subr.mxu0 0.0
    %733 = vmatpush1.msra.mxu0 %v713
    %734 = vmatprep.subr.mxu0 0.0
    %735 = vmatpush1.msra.mxu0 %v714
    %736 = vmatprep.subr.mxu0 0.0
    %737 = vmatpush1.msra.mxu0 %v715
    %738 = vmatprep.subr.mxu0 0.0
    %739 = vmatpush1.msra.mxu0 %v716
    %740 = vmatprep.subr.mxu0 0.0
    %741 = vmatpush1.msra.mxu0 %v717
    %742 = vmatprep.subr.mxu0 0.0
    %743 = vmatpush1.msra.mxu0 %v718
    %744 = vmatprep.subr.mxu0 0.0
    %745 = vmatpush1.msra.mxu0 %v719
    %746 = vmatprep.subr.mxu0 0.0
    %747 = vmatpush1.msra.mxu0 %v720
    %748 = vmatprep.subr.mxu0 0.0
    %749 = vmatpush1.msra.mxu0 %v721
    %750 = vmatprep.subr.mxu0 0.0
    %751 = vmatpush1.msra.mxu0 %v722
    %752 = vmatprep.subr.mxu0 0.0
    %753 = vmatpush1.msra.mxu0 %v723
    %754 = vmatprep.subr.mxu0 0.0
    %755 = vmatpush1.msra.mxu0 %v724
    %756 = vmatprep.subr.mxu0 0.0
    %757 = vmatpush1.msra.mxu0 %v725
    %758 = vmatprep.subr.mxu0 0.0
    %759 = vmatpush1.msra.mxu0 0.0
    %760 = vmatprep.subr.mxu0 0.0
    %761 = vmatpush1.msra.mxu0 0.0
    %762 = vmatprep.subr.mxu0 0.0
    %763 = vmatpush1.msra.mxu0 0.0
    %764 = vmatprep.subr.mxu0 0.0
    %765 = vmatpush1.msra.mxu0 0.0
    %766 = vmatprep.subr.mxu0 0.0
    %767 = vmatpush1.msra.mxu0 0.0
    %768 = vmatprep.subr.mxu0 0.0
    %769 = vmatpush1.msra.mxu0 0.0
    %770 = vmatprep.subr.mxu0 0.0
    %771 = vmatpush1.msra.mxu0 0.0
    %772 = vmatprep.subr.mxu0 0.0
    %773 = vmatpush1.msra.mxu0 0.0
    %774 = vmatprep.subr.mxu0 0.0
    %775 = vmatpush1.msra.mxu0 0.0
    %776 = vmatprep.subr.mxu0 0.0
    %777 = vmatpush1.msra.mxu0 0.0
    %778 = vmatprep.subr.mxu0 0.0
    %779 = vmatpush1.msra.mxu0 0.0
    %780 = vmatprep.subr.mxu0 0.0
    %781 = vmatpush1.msra.mxu0 0.0
    %782 = vmatprep.subr.mxu0 0.0
    %783 = vmatpush1.msra.mxu0 0.0
    %784 = vmatprep.subr.mxu0 0.0
    %785 = vmatpush1.msra.mxu0 0.0
    %786 = vmatprep.subr.mxu0 0.0
    %787 = vmatpush1.msra.mxu0 0.0
    %788 = vmatprep.subr.mxu0 0.0
    %789 = vmatpush1.msra.mxu0 0.0
    %790 = vmatprep.mubr.f32.mxu0 0.0
    %791 = vmatmul.mubr.f32.gmra.mrb[0].mxu0 %v691
    %v792 = vpop.f32.mrb[0].mxu0
    %v793 = vadd.f32 0.0, %v792
    %v794 = vpop.f32.mrb[0].mxu0
    %795 = vdwg.mxu0
    %796 = vmatprep.subr.mxu0 0.0
    %797 = vmatpush1.msra.mxu0 %v693
    %798 = vmatprep.subr.mxu0 0.0
    %799 = vmatpush1.msra.mxu0 %v694
    %800 = vmatprep.subr.mxu0 0.0
    %801 = vmatpush1.msra.mxu0 %v695
    %802 = vmatprep.subr.mxu0 0.0
    %803 = vmatpush1.msra.mxu0 %v696
    %804 = vmatprep.subr.mxu0 0.0
    %805 = vmatpush1.msra.mxu0 %v697
    %806 = vmatprep.subr.mxu0 0.0
    %807 = vmatpush1.msra.mxu0 %v698
    %808 = vmatprep.subr.mxu0 0.0
    %809 = vmatpush1.msra.mxu0 %v699
    %810 = vmatprep.subr.mxu0 0.0
    %811 = vmatpush1.msra.mxu0 %v700
    %812 = vmatprep.subr.mxu0 0.0
    %813 = vmatpush1.msra.mxu0 %v701
    %814 = vmatprep.subr.mxu0 0.0
    %815 = vmatpush1.msra.mxu0 %v702
    %816 = vmatprep.subr.mxu0 0.0
    %817 = vmatpush1.msra.mxu0 %v703
    %818 = vmatprep.subr.mxu0 0.0
    %819 = vmatpush1.msra.mxu0 %v704
    %820 = vmatprep.subr.mxu0 0.0
    %821 = vmatpush1.msra.mxu0 %v705
    %822 = vmatprep.subr.mxu0 0.0
    %823 = vmatpush1.msra.mxu0 %v706
    %824 = vmatprep.subr.mxu0 0.0
    %825 = vmatpush1.msra.mxu0 %v707
    %826 = vmatprep.subr.mxu0 0.0
    %827 = vmatpush1.msra.mxu0 %v708
    %828 = vmatprep.subr.mxu0 0.0
    %829 = vmatpush1.msra.mxu0 0.0
    %830 = vmatprep.subr.mxu0 0.0
    %831 = vmatpush1.msra.mxu0 0.0
    %832 = vmatprep.subr.mxu0 0.0
    %833 = vmatpush1.msra.mxu0 0.0
    %834 = vmatprep.subr.mxu0 0.0
    %835 = vmatpush1.msra.mxu0 0.0
    %836 = vmatprep.subr.mxu0 0.0
    %837 = vmatpush1.msra.mxu0 0.0
    %838 = vmatprep.subr.mxu0 0.0
    %839 = vmatpush1.msra.mxu0 0.0
    %840 = vmatprep.subr.mxu0 0.0
    %841 = vmatpush1.msra.mxu0 0.0
    %842 = vmatprep.subr.mxu0 0.0
    %843 = vmatpush1.msra.mxu0 0.0
    %844 = vmatprep.subr.mxu0 0.0
    %845 = vmatpush1.msra.mxu0 0.0
    %846 = vmatprep.subr.mxu0 0.0
    %847 = vmatpush1.msra.mxu0 0.0
    %848 = vmatprep.subr.mxu0 0.0
    %849 = vmatpush1.msra.mxu0 0.0
    %850 = vmatprep.subr.mxu0 0.0
    %851 = vmatpush1.msra.mxu0 0.0
    %852 = vmatprep.subr.mxu0 0.0
    %853 = vmatpush1.msra.mxu0 0.0
    %854 = vmatprep.subr.mxu0 0.0
    %855 = vmatpush1.msra.mxu0 0.0
    %856 = vmatprep.subr.mxu0 0.0
    %857 = vmatpush1.msra.mxu0 0.0
    %858 = vmatprep.subr.mxu0 0.0
    %859 = vmatpush1.msra.mxu0 0.0
    %860 = vmatprep.mubr.f32.mxu0 0.0
    %861 = vmatmul.mubr.f32.gmra.mrb[0].mxu0 %v687
    %v862 = vpop.f32.mrb[0].mxu0
    %v863 = vadd.f32 %v793, %v862
    %v864 = vpop.f32.mrb[0].mxu0
    %865 = vdwg.mxu0
    %s866 = scalar_lea.vmem %s5, 1
    %v867 = vld [vmem:[%s866] sm:$0x1]
    %v869 = vlaneseq
    %v870 = vshrl.u32 %v869, 7
    %v871 = vsub.s32 0, %v870
    %v872 = vrot.slane %v867, %v871
    %v874 = vadd.f32 %v863, %v872
    %vm875 = vcmp.gt.f32.partialorder %v874, 0.0
    %v876 = vmul.f32 %v874, 0.01
    %v877 = vsel %vm875, %v874, %v876
    %v878 = vadd.f32 %v687, %v877
    %879 = vst [vmem:[#allocation2 + $0x20] sm:$0xff] %v878
    %880 = vst [vmem:[#allocation3] sm:$0xff] 3e+38
    %s881 = sld [smem:[#allocation5 + $0x48]]
    %s882 = sld [smem:[#allocation5 + $0x54]]
    %s883 = sadd.s32 %s881, 32
    %s884 = scalar_lea.vmem [#allocation2], %s883
    %v885 = vld [vmem:[%s884] sm:$0x1]
    %s886 = scalar_lea.vmem [#allocation3], %s882
    %v887 = vld [vmem:[%s886] sm:$0x1]
    %v888 = vmin.f32 %v887, %v885
    %889 = vst [vmem:[%s886] sm:$0x1] %v888
    %s890 = sld [smem:[#allocation5 + $0x49]]
    %s891 = sld [smem:[#allocation5 + $0x55]]
    %s892 = sadd.s32 %s890, 32
    %s893 = scalar_lea.vmem [#allocation2], %s892
    %v894 = vld [vmem:[%s893] sm:$0x1]
    %s895 = scalar_lea.vmem [#allocation3], %s891
    %v896 = vld [vmem:[%s895] sm:$0x1]
    %v897 = vmin.f32 %v896, %v894
    %898 = vst [vmem:[%s895] sm:$0x1] %v897
    %s899 = sld [smem:[#allocation5 + $0x4a]]
    %s900 = sld [smem:[#allocation5 + $0x56]]
    %s901 = sadd.s32 %s899, 32
    %s902 = scalar_lea.vmem [#allocation2], %s901
    %v903 = vld [vmem:[%s902] sm:$0x1]
    %s904 = scalar_lea.vmem [#allocation3], %s900
    %v905 = vld [vmem:[%s904] sm:$0x1]
    %v906 = vmin.f32 %v905, %v903
    %907 = vst [vmem:[%s904] sm:$0x1] %v906
    %s908 = sld [smem:[#allocation5 + $0x4b]]
    %s909 = sld [smem:[#allocation5 + $0x57]]
    %s910 = sadd.s32 %s908, 32
    %s911 = scalar_lea.vmem [#allocation2], %s910
    %v912 = vld [vmem:[%s911] sm:$0x1]
    %s913 = scalar_lea.vmem [#allocation3], %s909
    %v914 = vld [vmem:[%s913] sm:$0x1]
    %v915 = vmin.f32 %v914, %v912
    %916 = vst [vmem:[%s913] sm:$0x1] %v915
    %s917 = sld [smem:[#allocation5 + $0x4c]]
    %s918 = sld [smem:[#allocation5 + $0x58]]
    %s919 = sadd.s32 %s917, 32
    %s920 = scalar_lea.vmem [#allocation2], %s919
    %v921 = vld [vmem:[%s920] sm:$0x1]
    %s922 = scalar_lea.vmem [#allocation3], %s918
    %v923 = vld [vmem:[%s922] sm:$0x1]
    %v924 = vmin.f32 %v923, %v921
    %925 = vst [vmem:[%s922] sm:$0x1] %v924
    %s926 = sld [smem:[#allocation5 + $0x4d]]
    %s927 = sld [smem:[#allocation5 + $0x59]]
    %s928 = sadd.s32 %s926, 32
    %s929 = scalar_lea.vmem [#allocation2], %s928
    %v930 = vld [vmem:[%s929] sm:$0x1]
    %s931 = scalar_lea.vmem [#allocation3], %s927
    %v932 = vld [vmem:[%s931] sm:$0x1]
    %v933 = vmin.f32 %v932, %v930
    %934 = vst [vmem:[%s931] sm:$0x1] %v933
    %s935 = sld [smem:[#allocation5 + $0x4e]]
    %s936 = sld [smem:[#allocation5 + $0x5a]]
    %s937 = sadd.s32 %s935, 32
    %s938 = scalar_lea.vmem [#allocation2], %s937
    %v939 = vld [vmem:[%s938] sm:$0x1]
    %s940 = scalar_lea.vmem [#allocation3], %s936
    %v941 = vld [vmem:[%s940] sm:$0x1]
    %v942 = vmin.f32 %v941, %v939
    %943 = vst [vmem:[%s940] sm:$0x1] %v942
    %s944 = sld [smem:[#allocation5 + $0x4f]]
    %s945 = sld [smem:[#allocation5 + $0x5b]]
    %s946 = sadd.s32 %s944, 32
    %s947 = scalar_lea.vmem [#allocation2], %s946
    %v948 = vld [vmem:[%s947] sm:$0x1]
    %s949 = scalar_lea.vmem [#allocation3], %s945
    %v950 = vld [vmem:[%s949] sm:$0x1]
    %v951 = vmin.f32 %v950, %v948
    %952 = vst [vmem:[%s949] sm:$0x1] %v951
    %s953 = sld [smem:[#allocation5 + $0x50]]
    %s954 = sld [smem:[#allocation5 + $0x5c]]
    %s955 = sadd.s32 %s953, 32
    %s956 = scalar_lea.vmem [#allocation2], %s955
    %v957 = vld [vmem:[%s956] sm:$0x1]
    %s958 = scalar_lea.vmem [#allocation3], %s954
    %v959 = vld [vmem:[%s958] sm:$0x1]
    %v960 = vmin.f32 %v959, %v957
    %961 = vst [vmem:[%s958] sm:$0x1] %v960
    %s962 = sld [smem:[#allocation5 + $0x51]]
    %s963 = sld [smem:[#allocation5 + $0x5d]]
    %s964 = sadd.s32 %s962, 32
    %s965 = scalar_lea.vmem [#allocation2], %s964
    %v966 = vld [vmem:[%s965] sm:$0x1]
    %s967 = scalar_lea.vmem [#allocation3], %s963
    %v968 = vld [vmem:[%s967] sm:$0x1]
    %v969 = vmin.f32 %v968, %v966
    %970 = vst [vmem:[%s967] sm:$0x1] %v969
    %s971 = sld [smem:[#allocation5 + $0x52]]
    %s972 = sld [smem:[#allocation5 + $0x5e]]
    %s973 = sadd.s32 %s971, 32
    %s974 = scalar_lea.vmem [#allocation2], %s973
    %v975 = vld [vmem:[%s974] sm:$0x1]
    %s976 = scalar_lea.vmem [#allocation3], %s972
    %v977 = vld [vmem:[%s976] sm:$0x1]
    %v978 = vmin.f32 %v977, %v975
    %979 = vst [vmem:[%s976] sm:$0x1] %v978
    %s980 = sld [smem:[#allocation5 + $0x53]]
    %s981 = sld [smem:[#allocation5 + $0x5f]]
    %s982 = sadd.s32 %s980, 32
    %s983 = scalar_lea.vmem [#allocation2], %s982
    %v984 = vld [vmem:[%s983] sm:$0x1]
    %s985 = scalar_lea.vmem [#allocation3], %s981
    %v986 = vld [vmem:[%s985] sm:$0x1]
    %v987 = vmin.f32 %v986, %v984
    %988 = vst [vmem:[%s985] sm:$0x1] %v987
    %v989 = vld [vmem:[#allocation2 + $0x28] sm:$0xff]
    %v990 = vld [vmem:[#allocation3] sm:$0xff]
    %vm991 = vcmp.lt.f32.partialorder %v990, 1e+38
    %v992 = vsub.f32 %v989, %v990
    %v993 = vsel %vm991, %v992, 0.0
    %s994 = scalar_lea.vmem %s3, 256
    %v995 = vld [vmem:[%s994] sm:$0xff]
    %v996 = vld [vmem:[%s994 + $0x8] sm:$0xff]
    %v997 = vld [vmem:[%s994 + $0x10] sm:$0xff]
    %v998 = vld [vmem:[%s994 + $0x18] sm:$0xff]
    %v999 = vld [vmem:[%s994 + $0x20] sm:$0xff]
    %v1000 = vld [vmem:[%s994 + $0x28] sm:$0xff]
    %v1001 = vld [vmem:[%s994 + $0x30] sm:$0xff]
    %v1002 = vld [vmem:[%s994 + $0x38] sm:$0xff]
    %v1003 = vld [vmem:[%s994 + $0x40] sm:$0xff]
    %v1004 = vld [vmem:[%s994 + $0x48] sm:$0xff]
    %v1005 = vld [vmem:[%s994 + $0x50] sm:$0xff]
    %v1006 = vld [vmem:[%s994 + $0x58] sm:$0xff]
    %v1007 = vld [vmem:[%s994 + $0x60] sm:$0xff]
    %v1008 = vld [vmem:[%s994 + $0x68] sm:$0xff]
    %v1009 = vld [vmem:[%s994 + $0x70] sm:$0xff]
    %v1010 = vld [vmem:[%s994 + $0x78] sm:$0xff]
    %s1011 = scalar_lea.vmem %s4, 256
    %v1012 = vld [vmem:[%s1011] sm:$0xff]
    %v1013 = vld [vmem:[%s1011 + $0x8] sm:$0xff]
    %v1014 = vld [vmem:[%s1011 + $0x10] sm:$0xff]
    %v1015 = vld [vmem:[%s1011 + $0x18] sm:$0xff]
    %v1016 = vld [vmem:[%s1011 + $0x20] sm:$0xff]
    %v1017 = vld [vmem:[%s1011 + $0x28] sm:$0xff]
    %v1018 = vld [vmem:[%s1011 + $0x30] sm:$0xff]
    %v1019 = vld [vmem:[%s1011 + $0x38] sm:$0xff]
    %v1020 = vld [vmem:[%s1011 + $0x40] sm:$0xff]
    %v1021 = vld [vmem:[%s1011 + $0x48] sm:$0xff]
    %v1022 = vld [vmem:[%s1011 + $0x50] sm:$0xff]
    %v1023 = vld [vmem:[%s1011 + $0x58] sm:$0xff]
    %v1024 = vld [vmem:[%s1011 + $0x60] sm:$0xff]
    %v1025 = vld [vmem:[%s1011 + $0x68] sm:$0xff]
    %v1026 = vld [vmem:[%s1011 + $0x70] sm:$0xff]
    %v1027 = vld [vmem:[%s1011 + $0x78] sm:$0xff]
    %1028 = vmatprep.subr.mxu0 0.0
    %1029 = vmatpush1.msra.mxu0 %v1012
    %1030 = vmatprep.subr.mxu0 0.0
    %1031 = vmatpush1.msra.mxu0 %v1013
    %1032 = vmatprep.subr.mxu0 0.0
    %1033 = vmatpush1.msra.mxu0 %v1014
    %1034 = vmatprep.subr.mxu0 0.0
    %1035 = vmatpush1.msra.mxu0 %v1015
    %1036 = vmatprep.subr.mxu0 0.0
    %1037 = vmatpush1.msra.mxu0 %v1016
    %1038 = vmatprep.subr.mxu0 0.0
    %1039 = vmatpush1.msra.mxu0 %v1017
    %1040 = vmatprep.subr.mxu0 0.0
    %1041 = vmatpush1.msra.mxu0 %v1018
    %1042 = vmatprep.subr.mxu0 0.0
    %1043 = vmatpush1.msra.mxu0 %v1019
    %1044 = vmatprep.subr.mxu0 0.0
    %1045 = vmatpush1.msra.mxu0 %v1020
    %1046 = vmatprep.subr.mxu0 0.0
    %1047 = vmatpush1.msra.mxu0 %v1021
    %1048 = vmatprep.subr.mxu0 0.0
    %1049 = vmatpush1.msra.mxu0 %v1022
    %1050 = vmatprep.subr.mxu0 0.0
    %1051 = vmatpush1.msra.mxu0 %v1023
    %1052 = vmatprep.subr.mxu0 0.0
    %1053 = vmatpush1.msra.mxu0 %v1024
    %1054 = vmatprep.subr.mxu0 0.0
    %1055 = vmatpush1.msra.mxu0 %v1025
    %1056 = vmatprep.subr.mxu0 0.0
    %1057 = vmatpush1.msra.mxu0 %v1026
    %1058 = vmatprep.subr.mxu0 0.0
    %1059 = vmatpush1.msra.mxu0 %v1027
    %1060 = vmatprep.subr.mxu0 0.0
    %1061 = vmatpush1.msra.mxu0 0.0
    %1062 = vmatprep.subr.mxu0 0.0
    %1063 = vmatpush1.msra.mxu0 0.0
    %1064 = vmatprep.subr.mxu0 0.0
    %1065 = vmatpush1.msra.mxu0 0.0
    %1066 = vmatprep.subr.mxu0 0.0
    %1067 = vmatpush1.msra.mxu0 0.0
    %1068 = vmatprep.subr.mxu0 0.0
    %1069 = vmatpush1.msra.mxu0 0.0
    %1070 = vmatprep.subr.mxu0 0.0
    %1071 = vmatpush1.msra.mxu0 0.0
    %1072 = vmatprep.subr.mxu0 0.0
    %1073 = vmatpush1.msra.mxu0 0.0
    %1074 = vmatprep.subr.mxu0 0.0
    %1075 = vmatpush1.msra.mxu0 0.0
    %1076 = vmatprep.subr.mxu0 0.0
    %1077 = vmatpush1.msra.mxu0 0.0
    %1078 = vmatprep.subr.mxu0 0.0
    %1079 = vmatpush1.msra.mxu0 0.0
    %1080 = vmatprep.subr.mxu0 0.0
    %1081 = vmatpush1.msra.mxu0 0.0
    %1082 = vmatprep.subr.mxu0 0.0
    %1083 = vmatpush1.msra.mxu0 0.0
    %1084 = vmatprep.subr.mxu0 0.0
    %1085 = vmatpush1.msra.mxu0 0.0
    %1086 = vmatprep.subr.mxu0 0.0
    %1087 = vmatpush1.msra.mxu0 0.0
    %1088 = vmatprep.subr.mxu0 0.0
    %1089 = vmatpush1.msra.mxu0 0.0
    %1090 = vmatprep.subr.mxu0 0.0
    %1091 = vmatpush1.msra.mxu0 0.0
    %1092 = vmatprep.mubr.f32.mxu0 0.0
    %1093 = vmatmul.mubr.f32.gmra.mrb[0].mxu0 %v993
    %v1094 = vpop.f32.mrb[0].mxu0
    %v1095 = vadd.f32 0.0, %v1094
    %v1096 = vpop.f32.mrb[0].mxu0
    %1097 = vdwg.mxu0
    %1098 = vmatprep.subr.mxu0 0.0
    %1099 = vmatpush1.msra.mxu0 %v995
    %1100 = vmatprep.subr.mxu0 0.0
    %1101 = vmatpush1.msra.mxu0 %v996
    %1102 = vmatprep.subr.mxu0 0.0
    %1103 = vmatpush1.msra.mxu0 %v997
    %1104 = vmatprep.subr.mxu0 0.0
    %1105 = vmatpush1.msra.mxu0 %v998
    %1106 = vmatprep.subr.mxu0 0.0
    %1107 = vmatpush1.msra.mxu0 %v999
    %1108 = vmatprep.subr.mxu0 0.0
    %1109 = vmatpush1.msra.mxu0 %v1000
    %1110 = vmatprep.subr.mxu0 0.0
    %1111 = vmatpush1.msra.mxu0 %v1001
    %1112 = vmatprep.subr.mxu0 0.0
    %1113 = vmatpush1.msra.mxu0 %v1002
    %1114 = vmatprep.subr.mxu0 0.0
    %1115 = vmatpush1.msra.mxu0 %v1003
    %1116 = vmatprep.subr.mxu0 0.0
    %1117 = vmatpush1.msra.mxu0 %v1004
    %1118 = vmatprep.subr.mxu0 0.0
    %1119 = vmatpush1.msra.mxu0 %v1005
    %1120 = vmatprep.subr.mxu0 0.0
    %1121 = vmatpush1.msra.mxu0 %v1006
    %1122 = vmatprep.subr.mxu0 0.0
    %1123 = vmatpush1.msra.mxu0 %v1007
    %1124 = vmatprep.subr.mxu0 0.0
    %1125 = vmatpush1.msra.mxu0 %v1008
    %1126 = vmatprep.subr.mxu0 0.0
    %1127 = vmatpush1.msra.mxu0 %v1009
    %1128 = vmatprep.subr.mxu0 0.0
    %1129 = vmatpush1.msra.mxu0 %v1010
    %1130 = vmatprep.subr.mxu0 0.0
    %1131 = vmatpush1.msra.mxu0 0.0
    %1132 = vmatprep.subr.mxu0 0.0
    %1133 = vmatpush1.msra.mxu0 0.0
    %1134 = vmatprep.subr.mxu0 0.0
    %1135 = vmatpush1.msra.mxu0 0.0
    %1136 = vmatprep.subr.mxu0 0.0
    %1137 = vmatpush1.msra.mxu0 0.0
    %1138 = vmatprep.subr.mxu0 0.0
    %1139 = vmatpush1.msra.mxu0 0.0
    %1140 = vmatprep.subr.mxu0 0.0
    %1141 = vmatpush1.msra.mxu0 0.0
    %1142 = vmatprep.subr.mxu0 0.0
    %1143 = vmatpush1.msra.mxu0 0.0
    %1144 = vmatprep.subr.mxu0 0.0
    %1145 = vmatpush1.msra.mxu0 0.0
    %1146 = vmatprep.subr.mxu0 0.0
    %1147 = vmatpush1.msra.mxu0 0.0
    %1148 = vmatprep.subr.mxu0 0.0
    %1149 = vmatpush1.msra.mxu0 0.0
    %1150 = vmatprep.subr.mxu0 0.0
    %1151 = vmatpush1.msra.mxu0 0.0
    %1152 = vmatprep.subr.mxu0 0.0
    %1153 = vmatpush1.msra.mxu0 0.0
    %1154 = vmatprep.subr.mxu0 0.0
    %1155 = vmatpush1.msra.mxu0 0.0
    %1156 = vmatprep.subr.mxu0 0.0
    %1157 = vmatpush1.msra.mxu0 0.0
    %1158 = vmatprep.subr.mxu0 0.0
    %1159 = vmatpush1.msra.mxu0 0.0
    %1160 = vmatprep.subr.mxu0 0.0
    %1161 = vmatpush1.msra.mxu0 0.0
    %1162 = vmatprep.mubr.f32.mxu0 0.0
    %1163 = vmatmul.mubr.f32.gmra.mrb[0].mxu0 %v989
    %v1164 = vpop.f32.mrb[0].mxu0
    %v1165 = vadd.f32 %v1095, %v1164
    %v1166 = vpop.f32.mrb[0].mxu0
    %1167 = vdwg.mxu0
    %s1168 = scalar_lea.vmem %s5, 2
    %v1169 = vld [vmem:[%s1168] sm:$0x1]
    %v1171 = vlaneseq
    %v1172 = vshrl.u32 %v1171, 7
    %v1173 = vsub.s32 0, %v1172
    %v1174 = vrot.slane %v1169, %v1173
    %v1176 = vadd.f32 %v1165, %v1174
    %vm1177 = vcmp.gt.f32.partialorder %v1176, 0.0
    %v1178 = vmul.f32 %v1176, 0.01
    %v1179 = vsel %vm1177, %v1176, %v1178
    %v1180 = vadd.f32 %v989, %v1179
    %1181 = vst [vmem:[#allocation2 + $0x28] sm:$0xff] %v1180
    %v1182 = vld [vmem:[#allocation2 + $0x28] sm:$0xff]
    %1183 = vst [vmem:[#allocation6] sm:$0xff] %v1182
    // Predicated region
    $region22: #{brep_face_encoder.1} parent=1 // pred_check
      _
    $region23: #{brep_face_encoder.1} parent=1 // pred_check_branch
      %1185 = sbr.rel (0) target = $region25
    $region24: #{brep_face_encoder.1} parent=1 // pred_region
      %s1187 = ssub.s32 128, 128
      %1188 = vsyncadd [#allocation7], %s1187
      %s1190 = sshll.u32 [#allocation6], 4
      %s1191 = int_to_ptr.vmem [resolvable:$true] %s1190
      %1193 = dma.vmem_to_hbm [thread:$0]  %s1191, 128, %s6, [#allocation7]
    $region25: #{brep_face_encoder.1} parent=1 // pred_fallthru
      _
    // Predicated region
    $region26: #{brep_face_encoder.1} parent=1 // pred_check
      _
    $region27: #{brep_face_encoder.1} parent=1 // pred_check_branch
      %1195 = sbr.rel (0) target = $region29
    $region28: #{brep_face_encoder.1} parent=1 // pred_region
      %1196 = dma.done [#allocation7], 128
    $region29: #{brep_face_encoder.1} parent=1 // pred_fallthru
      _
    %1197 = vsyncpa [#allocation7], 1

</llo_original>
